<compile_context>
chip_gen: v7x
topology: tpu7x:2x2x1
jax: 0.10.0
libtpu: 0.0.40
codegen_flags: <defaults>
</compile_context>

<pallas_src>
import functools

import jax
import jax.numpy as jnp
from jax.experimental import pallas as pl
from jax.experimental.pallas import tpu as pltpu

EPS = 1e-5


# ---------------------------------------------------------------------------
# In-kernel helpers
# ---------------------------------------------------------------------------
def _dwconv_channel(xc, w_smem, c, *, K, H, W):
    """KxK depthwise 'same' conv (stride 1) for a single channel.

    xc     : (H, W) f32 value (one channel of one sample, already in VMEM).
    w_smem : (Cin, K*K) f32 SMEM ref, row-major over the (ki, kj) taps.
    Zero padding is materialized in VMEM (no jnp.pad / extra HBM pass in the wrapper).
    """
    p = (K - 1) // 2
    if p:
        zrow = jnp.zeros((p, W), jnp.float32)
        xp = jnp.concatenate([zrow, xc, zrow], axis=0)          # (H + 2p, W)
        zcol = jnp.zeros((H + 2 * p, p), jnp.float32)
        xp = jnp.concatenate([zcol, xp, zcol], axis=1)          # (H + 2p, W + 2p)
    else:
        xp = xc
    acc = jnp.zeros((H, W), jnp.float32)
    for ki in range(K):
        for kj in range(K):
            w = w_smem[c, ki * K + kj]                          # scalar weight from SMEM
            acc = acc + xp[ki:ki + H, kj:kj + W] * w            # static shifted slice
    return acc


def _dw_stats_kernel(x_ref, dww_ref, sum_ref, ssq_ref, *, K, Cin, H, W):
    """Pass 1: per-sample partial batch statistics of the depthwise conv output.

    x_ref  : (1, Cin, H, W) VMEM block (one sample)
    dww_ref: (Cin, K*K)     SMEM depthwise weights
    sum_ref, ssq_ref: (1, Cin, 1, W) VMEM partials (reduced over H; the wrapper finishes
        the tiny reduction over N and W and derives the global BN scale/shift).
    """
    # TODO(synk): for large Cin this Python unroll should become a channel-vectorized
    # (sublane-packed / MXU) path; DWConv2 test channel counts are tiny (4/8).
    for c in range(Cin):
        conv = _dwconv_channel(x_ref[0, c], dww_ref, c, K=K, H=H, W=W)
        sum_ref[0, c] = jnp.sum(conv, axis=0, keepdims=True)
        ssq_ref[0, c] = jnp.sum(conv * conv, axis=0, keepdims=True)


def _dw_pw_fused_kernel(x_ref, dww_ref, dwsc_ref, dwsh_ref, pww_ref,
                        pwpre_ref, sum_ref, ssq_ref, *, K, Cin, Cout, H, W):
    """Pass 2: depthwise conv + BN(global scale/shift) + SiLU fused with the 1x1 conv.

    The depthwise activation never leaves VMEM/vregs (no HBM intermediate).  The 1x1 conv
    result is written pre-BN together with its per-sample partial batch statistics - the
    second BN also needs global stats before it can be applied, so it runs in pass 3.
    The 9-tap depthwise conv is recomputed here instead of round-tripping the pre-BN
    activation through HBM (cheaper for a memory-bound op).
    """
    act = []
    for c in range(Cin):
        conv = _dwconv_channel(x_ref[0, c], dww_ref, c, K=K, H=H, W=W)
        y = conv * dwsc_ref[c] + dwsh_ref[c]       # BN with precomputed global batch stats
        act.append(y * jax.nn.sigmoid(y))          # SiLU
    # 1x1 conv as VPU scalar FMAs; for real channel counts (>=64) switch to jnp.dot (MXU).
    for co in range(Cout):
        acc = act[0] * pww_ref[0, co]
        for ci in range(1, Cin):
            acc = acc + act[ci] * pww_ref[ci, co]
        pwpre_ref[0, co] = acc
        sum_ref[0, co] = jnp.sum(acc, axis=0, keepdims=True)
        ssq_ref[0, co] = jnp.sum(acc * acc, axis=0, keepdims=True)


def _bn_silu_rows_kernel(x_ref, sc_ref, sh_ref, o_ref):
    """Pass 3: y = x*scale + shift; out = y*sigmoid(y) on a lane-dense (rows, H*W) view."""
    y = x_ref[...] * sc_ref[...] + sh_ref[...]
    o_ref[...] = y * jax.nn.sigmoid(y)


# ---------------------------------------------------------------------------
# Wrapper
# ---------------------------------------------------------------------------
def _stats_to_scale_shift(part_sum, part_ssq, gamma, beta, count):
    """Global per-channel BN(training) scale/shift from per-sample partial sums."""
    s = jnp.sum(part_sum, axis=(0, 2, 3))
    ss = jnp.sum(part_ssq, axis=(0, 2, 3))
    mean = s / count
    var = jnp.maximum(ss / count - mean * mean, 0.0)     # biased variance (BN training)
    scale = gamma * jax.lax.rsqrt(var + EPS)
    shift = beta - mean * scale
    return scale, shift


def _pick_row_block(rows, hw, target_bytes=2 * 1024 * 1024):
    """Largest power-of-two row block that divides `rows`, is sublane-aligned and keeps a
    (rows_blk, hw) f32 tile around ~2 MiB (double-buffered tiles stay far below the
    32 MiB scoped-VMEM budget, which also fits v7x's 64 MiB physical VMEM)."""
    if rows % 8 != 0:
        return rows
    blk = 8
    while (blk * 2 <= rows and rows % (blk * 2) == 0
           and blk * 2 * hw * 4 <= target_bytes):
        blk *= 2
    return blk


def dwconv2_forward(x, dw_w, dw_gamma, dw_beta, pw_w, pw_gamma, pw_beta, *, ksize):
    """DWConv2 forward. x: (N, Cin, H, W) f32 (NCHW, as in PyTorch).

    dw_w : (Cin, K*K)  depthwise weight, torch (Cin, 1, K, K) flattened row-major over (K, K).
    pw_w : (Cin, Cout) pointwise weight, transpose of torch (Cout, Cin, 1, 1).
    *_gamma / *_beta : (C,) BatchNorm affine parameters.
    Returns (N, Cout, H, W) f32.
    """
    # TODO(synk): only stride=1 (the DWConv2 default) with odd ksize is implemented.
    N, Cin, H, W = x.shape
    Cout = pw_w.shape[1]
    HW = H * W
    count = jnp.float32(N * H * W)        # BN reduces over batch + spatial per channel

    params = pltpu.CompilerParams(
        dimension_semantics=("parallel",),            # megacore sharding on v7x; free elsewhere
        vmem_limit_bytes=32 * 1024 * 1024,
    )
    smem = pl.BlockSpec(memory_space=pltpu.MemorySpace.SMEM)
    sample_in = pl.BlockSpec((1, Cin, H, W), lambda i: (i, 0, 0, 0))
    # TODO(synk): for very large H*W, additionally tile H into row blocks with a
    # (ksize-1)//2 halo instead of one full sample per grid step.

    # -- pass 1: global batch statistics of the depthwise conv output (two-pass BN) ------
    dw_sum, dw_ssq = pl.pallas_call(
        functools.partial(_dw_stats_kernel, K=ksize, Cin=Cin, H=H, W=W),
        grid=(N,),
        in_specs=[sample_in, smem],
        out_specs=[pl.BlockSpec((1, Cin, 1, W), lambda i: (i, 0, 0, 0)),
                   pl.BlockSpec((1, Cin, 1, W), lambda i: (i, 0, 0, 0))],
        out_shape=[jax.ShapeDtypeStruct((N, Cin, 1, W), jnp.float32),
                   jax.ShapeDtypeStruct((N, Cin, 1, W), jnp.float32)],
        compiler_params=params,
    )(x, dw_w)
    dw_scale, dw_shift = _stats_to_scale_shift(dw_sum, dw_ssq, dw_gamma, dw_beta, count)

    # -- pass 2: fused depthwise conv + BN + SiLU + 1x1 conv (+ stats for the 2nd BN) ----
    pw_pre, pw_sum, pw_ssq = pl.pallas_call(
        functools.partial(_dw_pw_fused_kernel, K=ksize, Cin=Cin, Cout=Cout, H=H, W=W),
        grid=(N,),
        in_specs=[sample_in, smem, smem, smem, smem],
        out_specs=[pl.BlockSpec((1, Cout, H, W), lambda i: (i, 0, 0, 0)),
                   pl.BlockSpec((1, Cout, 1, W), lambda i: (i, 0, 0, 0)),
                   pl.BlockSpec((1, Cout, 1, W), lambda i: (i, 0, 0, 0))],
        out_shape=[jax.ShapeDtypeStruct((N, Cout, H, W), jnp.float32),
                   jax.ShapeDtypeStruct((N, Cout, 1, W), jnp.float32),
                   jax.ShapeDtypeStruct((N, Cout, 1, W), jnp.float32)],
        compiler_params=params,
    )(x, dw_w, dw_scale, dw_shift, pw_w)
    pw_scale, pw_shift = _stats_to_scale_shift(pw_sum, pw_ssq, pw_gamma, pw_beta, count)

    # -- pass 3: second BN + SiLU on a lane-dense (N*Cout, H*W) flat view ----------------
    rows = N * Cout
    rows_blk = _pick_row_block(rows, HW)
    sc_rows = jnp.tile(pw_scale.reshape(1, Cout), (N, 1)).reshape(rows, 1)
    sh_rows = jnp.tile(pw_shift.reshape(1, Cout), (N, 1)).reshape(rows, 1)
    out_flat = pl.pallas_call(
        _bn_silu_rows_kernel,
        grid=(rows // rows_blk,),
        in_specs=[pl.BlockSpec((rows_blk, HW), lambda i: (i, 0)),
                  pl.BlockSpec((rows_blk, 1), lambda i: (i, 0)),
                  pl.BlockSpec((rows_blk, 1), lambda i: (i, 0))],
        out_specs=pl.BlockSpec((rows_blk, HW), lambda i: (i, 0)),
        out_shape=jax.ShapeDtypeStruct((rows, HW), jnp.float32),
        compiler_params=params,
    )(pw_pre.reshape(rows, HW), sc_rows, sh_rows)
    return out_flat.reshape(N, Cout, H, W)


# ---------------------------------------------------------------------------
# Pure-JAX reference (same semantics) + smoke test
# ---------------------------------------------------------------------------
def _reference_forward(x, dw_w, dw_gamma, dw_beta, pw_w, pw_gamma, pw_beta, *, ksize):
    N, Cin, H, W = x.shape
    K = ksize
    p = (K - 1) // 2
    xp = jnp.pad(x, ((0, 0), (0, 0), (p, p), (p, p)))
    conv = jnp.zeros_like(x)
    for ki in range(K):
        for kj in range(K):
            conv = conv + xp[:, :, ki:ki + H, kj:kj + W] * dw_w[:, ki * K + kj][None, :, None, None]

    def bn_silu(t, gamma, beta):
        mean = t.mean(axis=(0, 2, 3), keepdims=True)
        var = t.var(axis=(0, 2, 3), keepdims=True)          # biased (BN training)
        y = (t - mean) * jax.lax.rsqrt(var + EPS)
        y = y * gamma.reshape(1, -1, 1, 1) + beta.reshape(1, -1, 1, 1)
        return y * jax.nn.sigmoid(y)

    a = bn_silu(conv, dw_gamma, dw_beta)
    pw = jnp.einsum("nchw,co->nohw", a, pw_w)
    return bn_silu(pw, pw_gamma, pw_beta)


if __name__ == "__main__":
    key = jax.random.PRNGKey(0)
    k_x, k_dw, k_pw = jax.random.split(key, 3)

    N, Cin, H, W = 2, 4, 16, 16
    Cout, K = 8, 3

    x = jax.random.normal(k_x, (N, Cin, H, W), dtype=jnp.float32)          # NCHW input
    # depthwise conv weight: torch (Cin, 1, K, K) -> (Cin, K*K), row-major over (K, K)
    dw_w = 0.1 * jax.random.normal(k_dw, (Cin, K * K), dtype=jnp.float32)
    # pointwise conv weight: torch (Cout, Cin, 1, 1) -> (Cin, Cout)
    pw_w = 0.1 * jax.random.normal(k_pw, (Cin, Cout), dtype=jnp.float32)
    # BatchNorm2d default affine init: gamma=1, beta=0
    dw_gamma = jnp.ones((Cin,), jnp.float32)
    dw_beta = jnp.zeros((Cin,), jnp.float32)
    pw_gamma = jnp.ones((Cout,), jnp.float32)
    pw_beta = jnp.zeros((Cout,), jnp.float32)

    out = dwconv2_forward(x, dw_w, dw_gamma, dw_beta, pw_w, pw_gamma, pw_beta, ksize=K)
    jax.block_until_ready(out)
    assert out.shape == (N, Cout, H, W)

    ref = _reference_forward(x, dw_w, dw_gamma, dw_beta, pw_w, pw_gamma, pw_beta, ksize=K)
    err = float(jnp.max(jnp.abs(out - ref)))
    assert jnp.allclose(out, ref, atol=1e-4, rtol=1e-4), err
    print("KERNEL_OK")
</pallas_src>

<mosaic_0001>
module attributes {stable_mosaic.version = 11 : i64} {
  func.func @_dw_stats_kernel(%arg0: i32, %arg1: memref<1x4x16x16xf32, #tpu.memory_space<vmem>>, %arg2: memref<4x9xf32, #tpu.memory_space<smem>>, %arg3: memref<1x4x1x16xf32, #tpu.memory_space<vmem>>, %arg4: memref<1x4x1x16xf32, #tpu.memory_space<vmem>>) attributes {dimension_semantics = [#tpu.dimension_semantics<parallel>], iteration_bounds = array<i64: 2>, scalar_prefetch = 0 : i64, scratch_operands = 0 : i64, tpu.core_type = #tpu.core_type<tc>, window_params = [{transform_indices = @transform_0, window_bounds = array<i64: 1, 4, 16, 16>}, {transform_indices = @transform_1, window_bounds = array<i64: 4, 9>}, {transform_indices = @transform_2, window_bounds = array<i64: 1, 4, 1, 16>}, {transform_indices = @transform_3, window_bounds = array<i64: 1, 4, 1, 16>}]} {
    %c0 = arith.constant 0 : index
    %c0_0 = arith.constant 0 : index
    %c0_1 = arith.constant 0 : index
    %c0_2 = arith.constant 0 : index
    %0 = vector.load %arg1[%c0, %c0_0, %c0_1, %c0_2] : memref<1x4x16x16xf32, #tpu.memory_space<vmem>>, vector<1x1x16x16xf32>
    %1 = vector.shape_cast %0 : vector<1x1x16x16xf32> to vector<16x16xf32>
    %cst = arith.constant 0.000000e+00 : f32
    %2 = vector.broadcast %cst : f32 to vector<1x16xf32>
    %3 = tpu.concatenate %2, %1, %2 in 0 : vector<1x16xf32>, vector<16x16xf32>, vector<1x16xf32> -> vector<18x16xf32>
    %cst_3 = arith.constant 0.000000e+00 : f32
    %4 = vector.broadcast %cst_3 : f32 to vector<18x1xf32>
    %5 = tpu.concatenate %4, %3, %4 in 1 : vector<18x1xf32>, vector<18x16xf32>, vector<18x1xf32> -> vector<18x18xf32>
    %cst_4 = arith.constant 0.000000e+00 : f32
    %6 = vector.broadcast %cst_4 : f32 to vector<16x16xf32>
    %c0_5 = arith.constant 0 : index
    %c0_6 = arith.constant 0 : index
    %7 = memref.load %arg2[%c0_5, %c0_6] : memref<4x9xf32, #tpu.memory_space<smem>>
    %8 = vector.extract_strided_slice %5 {offsets = [0, 0], sizes = [16, 16], strides = [1, 1]} : vector<18x18xf32> to vector<16x16xf32>
    %9 = vector.broadcast %7 : f32 to vector<16x16xf32>
    %10 = arith.mulf %8, %9 : vector<16x16xf32>
    %11 = arith.addf %6, %10 : vector<16x16xf32>
    %c0_7 = arith.constant 0 : index
    %c1 = arith.constant 1 : index
    %12 = memref.load %arg2[%c0_7, %c1] : memref<4x9xf32, #tpu.memory_space<smem>>
    %13 = vector.extract_strided_slice %5 {offsets = [0, 1], sizes = [16, 16], strides = [1, 1]} : vector<18x18xf32> to vector<16x16xf32>
    %14 = vector.broadcast %12 : f32 to vector<16x16xf32>
    %15 = arith.mulf %13, %14 : vector<16x16xf32>
    %16 = arith.addf %11, %15 : vector<16x16xf32>
    %c0_8 = arith.constant 0 : index
    %c2 = arith.constant 2 : index
    %17 = memref.load %arg2[%c0_8, %c2] : memref<4x9xf32, #tpu.memory_space<smem>>
    %18 = vector.extract_strided_slice %5 {offsets = [0, 2], sizes = [16, 16], strides = [1, 1]} : vector<18x18xf32> to vector<16x16xf32>
    %19 = vector.broadcast %17 : f32 to vector<16x16xf32>
    %20 = arith.mulf %18, %19 : vector<16x16xf32>
    %21 = arith.addf %16, %20 : vector<16x16xf32>
    %c0_9 = arith.constant 0 : index
    %c3 = arith.constant 3 : index
    %22 = memref.load %arg2[%c0_9, %c3] : memref<4x9xf32, #tpu.memory_space<smem>>
    %23 = vector.extract_strided_slice %5 {offsets = [1, 0], sizes = [16, 16], strides = [1, 1]} : vector<18x18xf32> to vector<16x16xf32>
    %24 = vector.broadcast %22 : f32 to vector<16x16xf32>
    %25 = arith.mulf %23, %24 : vector<16x16xf32>
    %26 = arith.addf %21, %25 : vector<16x16xf32>
    %c0_10 = arith.constant 0 : index
    %c4 = arith.constant 4 : index
    %27 = memref.load %arg2[%c0_10, %c4] : memref<4x9xf32, #tpu.memory_space<smem>>
    %28 = vector.extract_strided_slice %5 {offsets = [1, 1], sizes = [16, 16], strides = [1, 1]} : vector<18x18xf32> to vector<16x16xf32>
    %29 = vector.broadcast %27 : f32 to vector<16x16xf32>
    %30 = arith.mulf %28, %29 : vector<16x16xf32>
    %31 = arith.addf %26, %30 : vector<16x16xf32>
    %c0_11 = arith.constant 0 : index
    %c5 = arith.constant 5 : index
    %32 = memref.load %arg2[%c0_11, %c5] : memref<4x9xf32, #tpu.memory_space<smem>>
    %33 = vector.extract_strided_slice %5 {offsets = [1, 2], sizes = [16, 16], strides = [1, 1]} : vector<18x18xf32> to vector<16x16xf32>
    %34 = vector.broadcast %32 : f32 to vector<16x16xf32>
    %35 = arith.mulf %33, %34 : vector<16x16xf32>
    %36 = arith.addf %31, %35 : vector<16x16xf32>
    %c0_12 = arith.constant 0 : index
    %c6 = arith.constant 6 : index
    %37 = memref.load %arg2[%c0_12, %c6] : memref<4x9xf32, #tpu.memory_space<smem>>
    %38 = vector.extract_strided_slice %5 {offsets = [2, 0], sizes = [16, 16], strides = [1, 1]} : vector<18x18xf32> to vector<16x16xf32>
    %39 = vector.broadcast %37 : f32 to vector<16x16xf32>
    %40 = arith.mulf %38, %39 : vector<16x16xf32>
    %41 = arith.addf %36, %40 : vector<16x16xf32>
    %c0_13 = arith.constant 0 : index
    %c7 = arith.constant 7 : index
    %42 = memref.load %arg2[%c0_13, %c7] : memref<4x9xf32, #tpu.memory_space<smem>>
    %43 = vector.extract_strided_slice %5 {offsets = [2, 1], sizes = [16, 16], strides = [1, 1]} : vector<18x18xf32> to vector<16x16xf32>
    %44 = vector.broadcast %42 : f32 to vector<16x16xf32>
    %45 = arith.mulf %43, %44 : vector<16x16xf32>
    %46 = arith.addf %41, %45 : vector<16x16xf32>
    %c0_14 = arith.constant 0 : index
    %c8 = arith.constant 8 : index
    %47 = memref.load %arg2[%c0_14, %c8] : memref<4x9xf32, #tpu.memory_space<smem>>
    %48 = vector.extract_strided_slice %5 {offsets = [2, 2], sizes = [16, 16], strides = [1, 1]} : vector<18x18xf32> to vector<16x16xf32>
    %49 = vector.broadcast %47 : f32 to vector<16x16xf32>
    %50 = arith.mulf %48, %49 : vector<16x16xf32>
    %51 = arith.addf %46, %50 : vector<16x16xf32>
    %cst_15 = arith.constant dense<0.000000e+00> : vector<16xf32>
    %52 = vector.multi_reduction <add>, %51, %cst_15 [0] : vector<16x16xf32> to vector<16xf32>
    %53 = vector.shape_cast %52 : vector<16xf32> to vector<1x16xf32>
    %c0_16 = arith.constant 0 : index
    %c0_17 = arith.constant 0 : index
    %c0_18 = arith.constant 0 : index
    %c0_19 = arith.constant 0 : index
    %54 = vector.load %arg3[%c0_16, %c0_17, %c0_18, %c0_19] : memref<1x4x1x16xf32, #tpu.memory_space<vmem>>, vector<1x1x1x16xf32>
    %55 = vector.shape_cast %54 : vector<1x1x1x16xf32> to vector<1x16xf32>
    %56 = vector.shape_cast %53 : vector<1x16xf32> to vector<1x1x1x16xf32>
    tpu.vector_store %arg3[%c0_16, %c0_17, %c0_18, %c0_19], %56 {strides = array<i32>} : memref<1x4x1x16xf32, #tpu.memory_space<vmem>>, vector<1x1x1x16xf32>,
    %57 = arith.mulf %51, %51 : vector<16x16xf32>
    %cst_20 = arith.constant dense<0.000000e+00> : vector<16xf32>
    %58 = vector.multi_reduction <add>, %57, %cst_20 [0] : vector<16x16xf32> to vector<16xf32>
    %59 = vector.shape_cast %58 : vector<16xf32> to vector<1x16xf32>
    %c0_21 = arith.constant 0 : index
    %c0_22 = arith.constant 0 : index
    %c0_23 = arith.constant 0 : index
    %c0_24 = arith.constant 0 : index
    %60 = vector.load %arg4[%c0_21, %c0_22, %c0_23, %c0_24] : memref<1x4x1x16xf32, #tpu.memory_space<vmem>>, vector<1x1x1x16xf32>
    %61 = vector.shape_cast %60 : vector<1x1x1x16xf32> to vector<1x16xf32>
    %62 = vector.shape_cast %59 : vector<1x16xf32> to vector<1x1x1x16xf32>
    tpu.vector_store %arg4[%c0_21, %c0_22, %c0_23, %c0_24], %62 {strides = array<i32>} : memref<1x4x1x16xf32, #tpu.memory_space<vmem>>, vector<1x1x1x16xf32>,
    %c0_25 = arith.constant 0 : index
    %c1_26 = arith.constant 1 : index
    %c0_27 = arith.constant 0 : index
    %c0_28 = arith.constant 0 : index
    %63 = vector.load %arg1[%c0_25, %c1_26, %c0_27, %c0_28] : memref<1x4x16x16xf32, #tpu.memory_space<vmem>>, vector<1x1x16x16xf32>
    %64 = vector.shape_cast %63 : vector<1x1x16x16xf32> to vector<16x16xf32>
    %cst_29 = arith.constant 0.000000e+00 : f32
    %65 = vector.broadcast %cst_29 : f32 to vector<1x16xf32>
    %66 = tpu.concatenate %65, %64, %65 in 0 : vector<1x16xf32>, vector<16x16xf32>, vector<1x16xf32> -> vector<18x16xf32>
    %cst_30 = arith.constant 0.000000e+00 : f32
    %67 = vector.broadcast %cst_30 : f32 to vector<18x1xf32>
    %68 = tpu.concatenate %67, %66, %67 in 1 : vector<18x1xf32>, vector<18x16xf32>, vector<18x1xf32> -> vector<18x18xf32>
    %cst_31 = arith.constant 0.000000e+00 : f32
    %69 = vector.broadcast %cst_31 : f32 to vector<16x16xf32>
    %c1_32 = arith.constant 1 : index
    %c0_33 = arith.constant 0 : index
    %70 = memref.load %arg2[%c1_32, %c0_33] : memref<4x9xf32, #tpu.memory_space<smem>>
    %71 = vector.extract_strided_slice %68 {offsets = [0, 0], sizes = [16, 16], strides = [1, 1]} : vector<18x18xf32> to vector<16x16xf32>
    %72 = vector.broadcast %70 : f32 to vector<16x16xf32>
    %73 = arith.mulf %71, %72 : vector<16x16xf32>
    %74 = arith.addf %69, %73 : vector<16x16xf32>
    %c1_34 = arith.constant 1 : index
    %c1_35 = arith.constant 1 : index
    %75 = memref.load %arg2[%c1_34, %c1_35] : memref<4x9xf32, #tpu.memory_space<smem>>
    %76 = vector.extract_strided_slice %68 {offsets = [0, 1], sizes = [16, 16], strides = [1, 1]} : vector<18x18xf32> to vector<16x16xf32>
    %77 = vector.broadcast %75 : f32 to vector<16x16xf32>
    %78 = arith.mulf %76, %77 : vector<16x16xf32>
    %79 = arith.addf %74, %78 : vector<16x16xf32>
    %c1_36 = arith.constant 1 : index
    %c2_37 = arith.constant 2 : index
    %80 = memref.load %arg2[%c1_36, %c2_37] : memref<4x9xf32, #tpu.memory_space<smem>>
    %81 = vector.extract_strided_slice %68 {offsets = [0, 2], sizes = [16, 16], strides = [1, 1]} : vector<18x18xf32> to vector<16x16xf32>
    %82 = vector.broadcast %80 : f32 to vector<16x16xf32>
    %83 = arith.mulf %81, %82 : vector<16x16xf32>
    %84 = arith.addf %79, %83 : vector<16x16xf32>
    %c1_38 = arith.constant 1 : index
    %c3_39 = arith.constant 3 : index
    %85 = memref.load %arg2[%c1_38, %c3_39] : memref<4x9xf32, #tpu.memory_space<smem>>
    %86 = vector.extract_strided_slice %68 {offsets = [1, 0], sizes = [16, 16], strides = [1, 1]} : vector<18x18xf32> to vector<16x16xf32>
    %87 = vector.broadcast %85 : f32 to vector<16x16xf32>
    %88 = arith.mulf %86, %87 : vector<16x16xf32>
    %89 = arith.addf %84, %88 : vector<16x16xf32>
    %c1_40 = arith.constant 1 : index
    %c4_41 = arith.constant 4 : index
    %90 = memref.load %arg2[%c1_40, %c4_41] : memref<4x9xf32, #tpu.memory_space<smem>>
    %91 = vector.extract_strided_slice %68 {offsets = [1, 1], sizes = [16, 16], strides = [1, 1]} : vector<18x18xf32> to vector<16x16xf32>
    %92 = vector.broadcast %90 : f32 to vector<16x16xf32>
    %93 = arith.mulf %91, %92 : vector<16x16xf32>
    %94 = arith.addf %89, %93 : vector<16x16xf32>
    %c1_42 = arith.constant 1 : index
    %c5_43 = arith.constant 5 : index
    %95 = memref.load %arg2[%c1_42, %c5_43] : memref<4x9xf32, #tpu.memory_space<smem>>
    %96 = vector.extract_strided_slice %68 {offsets = [1, 2], sizes = [16, 16], strides = [1, 1]} : vector<18x18xf32> to vector<16x16xf32>
    %97 = vector.broadcast %95 : f32 to vector<16x16xf32>
    %98 = arith.mulf %96, %97 : vector<16x16xf32>
    %99 = arith.addf %94, %98 : vector<16x16xf32>
    %c1_44 = arith.constant 1 : index
    %c6_45 = arith.constant 6 : index
    %100 = memref.load %arg2[%c1_44, %c6_45] : memref<4x9xf32, #tpu.memory_space<smem>>
    %101 = vector.extract_strided_slice %68 {offsets = [2, 0], sizes = [16, 16], strides = [1, 1]} : vector<18x18xf32> to vector<16x16xf32>
    %102 = vector.broadcast %100 : f32 to vector<16x16xf32>
    %103 = arith.mulf %101, %102 : vector<16x16xf32>
    %104 = arith.addf %99, %103 : vector<16x16xf32>
    %c1_46 = arith.constant 1 : index
    %c7_47 = arith.constant 7 : index
    %105 = memref.load %arg2[%c1_46, %c7_47] : memref<4x9xf32, #tpu.memory_space<smem>>
    %106 = vector.extract_strided_slice %68 {offsets = [2, 1], sizes = [16, 16], strides = [1, 1]} : vector<18x18xf32> to vector<16x16xf32>
    %107 = vector.broadcast %105 : f32 to vector<16x16xf32>
    %108 = arith.mulf %106, %107 : vector<16x16xf32>
    %109 = arith.addf %104, %108 : vector<16x16xf32>
    %c1_48 = arith.constant 1 : index
    %c8_49 = arith.constant 8 : index
    %110 = memref.load %arg2[%c1_48, %c8_49] : memref<4x9xf32, #tpu.memory_space<smem>>
    %111 = vector.extract_strided_slice %68 {offsets = [2, 2], sizes = [16, 16], strides = [1, 1]} : vector<18x18xf32> to vector<16x16xf32>
    %112 = vector.broadcast %110 : f32 to vector<16x16xf32>
    %113 = arith.mulf %111, %112 : vector<16x16xf32>
    %114 = arith.addf %109, %113 : vector<16x16xf32>
    %cst_50 = arith.constant dense<0.000000e+00> : vector<16xf32>
    %115 = vector.multi_reduction <add>, %114, %cst_50 [0] : vector<16x16xf32> to vector<16xf32>
    %116 = vector.shape_cast %115 : vector<16xf32> to vector<1x16xf32>
    %c0_51 = arith.constant 0 : index
    %c1_52 = arith.constant 1 : index
    %c0_53 = arith.constant 0 : index
    %c0_54 = arith.constant 0 : index
    %117 = vector.load %arg3[%c0_51, %c1_52, %c0_53, %c0_54] : memref<1x4x1x16xf32, #tpu.memory_space<vmem>>, vector<1x1x1x16xf32>
    %118 = vector.shape_cast %117 : vector<1x1x1x16xf32> to vector<1x16xf32>
    %119 = vector.shape_cast %116 : vector<1x16xf32> to vector<1x1x1x16xf32>
    tpu.vector_store %arg3[%c0_51, %c1_52, %c0_53, %c0_54], %119 {strides = array<i32>} : memref<1x4x1x16xf32, #tpu.memory_space<vmem>>, vector<1x1x1x16xf32>,
    %120 = arith.mulf %114, %114 : vector<16x16xf32>
    %cst_55 = arith.constant dense<0.000000e+00> : vector<16xf32>
    %121 = vector.multi_reduction <add>, %120, %cst_55 [0] : vector<16x16xf32> to vector<16xf32>
    %122 = vector.shape_cast %121 : vector<16xf32> to vector<1x16xf32>
    %c0_56 = arith.constant 0 : index
    %c1_57 = arith.constant 1 : index
    %c0_58 = arith.constant 0 : index
    %c0_59 = arith.constant 0 : index
    %123 = vector.load %arg4[%c0_56, %c1_57, %c0_58, %c0_59] : memref<1x4x1x16xf32, #tpu.memory_space<vmem>>, vector<1x1x1x16xf32>
    %124 = vector.shape_cast %123 : vector<1x1x1x16xf32> to vector<1x16xf32>
    %125 = vector.shape_cast %122 : vector<1x16xf32> to vector<1x1x1x16xf32>
    tpu.vector_store %arg4[%c0_56, %c1_57, %c0_58, %c0_59], %125 {strides = array<i32>} : memref<1x4x1x16xf32, #tpu.memory_space<vmem>>, vector<1x1x1x16xf32>,
    %c0_60 = arith.constant 0 : index
    %c2_61 = arith.constant 2 : index
    %c0_62 = arith.constant 0 : index
    %c0_63 = arith.constant 0 : index
    %126 = vector.load %arg1[%c0_60, %c2_61, %c0_62, %c0_63] : memref<1x4x16x16xf32, #tpu.memory_space<vmem>>, vector<1x1x16x16xf32>
    %127 = vector.shape_cast %126 : vector<1x1x16x16xf32> to vector<16x16xf32>
    %cst_64 = arith.constant 0.000000e+00 : f32
    %128 = vector.broadcast %cst_64 : f32 to vector<1x16xf32>
    %129 = tpu.concatenate %128, %127, %128 in 0 : vector<1x16xf32>, vector<16x16xf32>, vector<1x16xf32> -> vector<18x16xf32>
    %cst_65 = arith.constant 0.000000e+00 : f32
    %130 = vector.broadcast %cst_65 : f32 to vector<18x1xf32>
    %131 = tpu.concatenate %130, %129, %130 in 1 : vector<18x1xf32>, vector<18x16xf32>, vector<18x1xf32> -> vector<18x18xf32>
    %cst_66 = arith.constant 0.000000e+00 : f32
    %132 = vector.broadcast %cst_66 : f32 to vector<16x16xf32>
    %c2_67 = arith.constant 2 : index
    %c0_68 = arith.constant 0 : index
    %133 = memref.load %arg2[%c2_67, %c0_68] : memref<4x9xf32, #tpu.memory_space<smem>>
    %134 = vector.extract_strided_slice %131 {offsets = [0, 0], sizes = [16, 16], strides = [1, 1]} : vector<18x18xf32> to vector<16x16xf32>
    %135 = vector.broadcast %133 : f32 to vector<16x16xf32>
    %136 = arith.mulf %134, %135 : vector<16x16xf32>
    %137 = arith.addf %132, %136 : vector<16x16xf32>
    %c2_69 = arith.constant 2 : index
    %c1_70 = arith.constant 1 : index
    %138 = memref.load %arg2[%c2_69, %c1_70] : memref<4x9xf32, #tpu.memory_space<smem>>
    %139 = vector.extract_strided_slice %131 {offsets = [0, 1], sizes = [16, 16], strides = [1, 1]} : vector<18x18xf32> to vector<16x16xf32>
    %140 = vector.broadcast %138 : f32 to vector<16x16xf32>
    %141 = arith.mulf %139, %140 : vector<16x16xf32>
    %142 = arith.addf %137, %141 : vector<16x16xf32>
    %c2_71 = arith.constant 2 : index
    %c2_72 = arith.constant 2 : index
    %143 = memref.load %arg2[%c2_71, %c2_72] : memref<4x9xf32, #tpu.memory_space<smem>>
    %144 = vector.extract_strided_slice %131 {offsets = [0, 2], sizes = [16, 16], strides = [1, 1]} : vector<18x18xf32> to vector<16x16xf32>
    %145 = vector.broadcast %143 : f32 to vector<16x16xf32>
    %146 = arith.mulf %144, %145 : vector<16x16xf32>
    %147 = arith.addf %142, %146 : vector<16x16xf32>
    %c2_73 = arith.constant 2 : index
    %c3_74 = arith.constant 3 : index
    %148 = memref.load %arg2[%c2_73, %c3_74] : memref<4x9xf32, #tpu.memory_space<smem>>
    %149 = vector.extract_strided_slice %131 {offsets = [1, 0], sizes = [16, 16], strides = [1, 1]} : vector<18x18xf32> to vector<16x16xf32>
    %150 = vector.broadcast %148 : f32 to vector<16x16xf32>
    %151 = arith.mulf %149, %150 : vector<16x16xf32>
    %152 = arith.addf %147, %151 : vector<16x16xf32>
    %c2_75 = arith.constant 2 : index
    %c4_76 = arith.constant 4 : index
    %153 = memref.load %arg2[%c2_75, %c4_76] : memref<4x9xf32, #tpu.memory_space<smem>>
    %154 = vector.extract_strided_slice %131 {offsets = [1, 1], sizes = [16, 16], strides = [1, 1]} : vector<18x18xf32> to vector<16x16xf32>
    %155 = vector.broadcast %153 : f32 to vector<16x16xf32>
    %156 = arith.mulf %154, %155 : vector<16x16xf32>
    %157 = arith.addf %152, %156 : vector<16x16xf32>
    %c2_77 = arith.constant 2 : index
    %c5_78 = arith.constant 5 : index
    %158 = memref.load %arg2[%c2_77, %c5_78] : memref<4x9xf32, #tpu.memory_space<smem>>
    %159 = vector.extract_strided_slice %131 {offsets = [1, 2], sizes = [16, 16], strides = [1, 1]} : vector<18x18xf32> to vector<16x16xf32>
    %160 = vector.broadcast %158 : f32 to vector<16x16xf32>
    %161 = arith.mulf %159, %160 : vector<16x16xf32>
    %162 = arith.addf %157, %161 : vector<16x16xf32>
    %c2_79 = arith.constant 2 : index
    %c6_80 = arith.constant 6 : index
    %163 = memref.load %arg2[%c2_79, %c6_80] : memref<4x9xf32, #tpu.memory_space<smem>>
    %164 = vector.extract_strided_slice %131 {offsets = [2, 0], sizes = [16, 16], strides = [1, 1]} : vector<18x18xf32> to vector<16x16xf32>
    %165 = vector.broadcast %163 : f32 to vector<16x16xf32>
    %166 = arith.mulf %164, %165 : vector<16x16xf32>
    %167 = arith.addf %162, %166 : vector<16x16xf32>
    %c2_81 = arith.constant 2 : index
    %c7_82 = arith.constant 7 : index
    %168 = memref.load %arg2[%c2_81, %c7_82] : memref<4x9xf32, #tpu.memory_space<smem>>
    %169 = vector.extract_strided_slice %131 {offsets = [2, 1], sizes = [16, 16], strides = [1, 1]} : vector<18x18xf32> to vector<16x16xf32>
    %170 = vector.broadcast %168 : f32 to vector<16x16xf32>
    %171 = arith.mulf %169, %170 : vector<16x16xf32>
    %172 = arith.addf %167, %171 : vector<16x16xf32>
    %c2_83 = arith.constant 2 : index
    %c8_84 = arith.constant 8 : index
    %173 = memref.load %arg2[%c2_83, %c8_84] : memref<4x9xf32, #tpu.memory_space<smem>>
    %174 = vector.extract_strided_slice %131 {offsets = [2, 2], sizes = [16, 16], strides = [1, 1]} : vector<18x18xf32> to vector<16x16xf32>
    %175 = vector.broadcast %173 : f32 to vector<16x16xf32>
    %176 = arith.mulf %174, %175 : vector<16x16xf32>
    %177 = arith.addf %172, %176 : vector<16x16xf32>
    %cst_85 = arith.constant dense<0.000000e+00> : vector<16xf32>
    %178 = vector.multi_reduction <add>, %177, %cst_85 [0] : vector<16x16xf32> to vector<16xf32>
    %179 = vector.shape_cast %178 : vector<16xf32> to vector<1x16xf32>
    %c0_86 = arith.constant 0 : index
    %c2_87 = arith.constant 2 : index
    %c0_88 = arith.constant 0 : index
    %c0_89 = arith.constant 0 : index
    %180 = vector.load %arg3[%c0_86, %c2_87, %c0_88, %c0_89] : memref<1x4x1x16xf32, #tpu.memory_space<vmem>>, vector<1x1x1x16xf32>
    %181 = vector.shape_cast %180 : vector<1x1x1x16xf32> to vector<1x16xf32>
    %182 = vector.shape_cast %179 : vector<1x16xf32> to vector<1x1x1x16xf32>
    tpu.vector_store %arg3[%c0_86, %c2_87, %c0_88, %c0_89], %182 {strides = array<i32>} : memref<1x4x1x16xf32, #tpu.memory_space<vmem>>, vector<1x1x1x16xf32>,
    %183 = arith.mulf %177, %177 : vector<16x16xf32>
    %cst_90 = arith.constant dense<0.000000e+00> : vector<16xf32>
    %184 = vector.multi_reduction <add>, %183, %cst_90 [0] : vector<16x16xf32> to vector<16xf32>
    %185 = vector.shape_cast %184 : vector<16xf32> to vector<1x16xf32>
    %c0_91 = arith.constant 0 : index
    %c2_92 = arith.constant 2 : index
    %c0_93 = arith.constant 0 : index
    %c0_94 = arith.constant 0 : index
    %186 = vector.load %arg4[%c0_91, %c2_92, %c0_93, %c0_94] : memref<1x4x1x16xf32, #tpu.memory_space<vmem>>, vector<1x1x1x16xf32>
    %187 = vector.shape_cast %186 : vector<1x1x1x16xf32> to vector<1x16xf32>
    %188 = vector.shape_cast %185 : vector<1x16xf32> to vector<1x1x1x16xf32>
    tpu.vector_store %arg4[%c0_91, %c2_92, %c0_93, %c0_94], %188 {strides = array<i32>} : memref<1x4x1x16xf32, #tpu.memory_space<vmem>>, vector<1x1x1x16xf32>,
    %c0_95 = arith.constant 0 : index
    %c3_96 = arith.constant 3 : index
    %c0_97 = arith.constant 0 : index
    %c0_98 = arith.constant 0 : index
    %189 = vector.load %arg1[%c0_95, %c3_96, %c0_97, %c0_98] : memref<1x4x16x16xf32, #tpu.memory_space<vmem>>, vector<1x1x16x16xf32>
    %190 = vector.shape_cast %189 : vector<1x1x16x16xf32> to vector<16x16xf32>
    %cst_99 = arith.constant 0.000000e+00 : f32
    %191 = vector.broadcast %cst_99 : f32 to vector<1x16xf32>
    %192 = tpu.concatenate %191, %190, %191 in 0 : vector<1x16xf32>, vector<16x16xf32>, vector<1x16xf32> -> vector<18x16xf32>
    %cst_100 = arith.constant 0.000000e+00 : f32
    %193 = vector.broadcast %cst_100 : f32 to vector<18x1xf32>
    %194 = tpu.concatenate %193, %192, %193 in 1 : vector<18x1xf32>, vector<18x16xf32>, vector<18x1xf32> -> vector<18x18xf32>
    %cst_101 = arith.constant 0.000000e+00 : f32
    %195 = vector.broadcast %cst_101 : f32 to vector<16x16xf32>
    %c3_102 = arith.constant 3 : index
    %c0_103 = arith.constant 0 : index
    %196 = memref.load %arg2[%c3_102, %c0_103] : memref<4x9xf32, #tpu.memory_space<smem>>
    %197 = vector.extract_strided_slice %194 {offsets = [0, 0], sizes = [16, 16], strides = [1, 1]} : vector<18x18xf32> to vector<16x16xf32>
    %198 = vector.broadcast %196 : f32 to vector<16x16xf32>
    %199 = arith.mulf %197, %198 : vector<16x16xf32>
    %200 = arith.addf %195, %199 : vector<16x16xf32>
    %c3_104 = arith.constant 3 : index
    %c1_105 = arith.constant 1 : index
    %201 = memref.load %arg2[%c3_104, %c1_105] : memref<4x9xf32, #tpu.memory_space<smem>>
    %202 = vector.extract_strided_slice %194 {offsets = [0, 1], sizes = [16, 16], strides = [1, 1]} : vector<18x18xf32> to vector<16x16xf32>
    %203 = vector.broadcast %201 : f32 to vector<16x16xf32>
    %204 = arith.mulf %202, %203 : vector<16x16xf32>
    %205 = arith.addf %200, %204 : vector<16x16xf32>
    %c3_106 = arith.constant 3 : index
    %c2_107 = arith.constant 2 : index
    %206 = memref.load %arg2[%c3_106, %c2_107] : memref<4x9xf32, #tpu.memory_space<smem>>
    %207 = vector.extract_strided_slice %194 {offsets = [0, 2], sizes = [16, 16], strides = [1, 1]} : vector<18x18xf32> to vector<16x16xf32>
    %208 = vector.broadcast %206 : f32 to vector<16x16xf32>
    %209 = arith.mulf %207, %208 : vector<16x16xf32>
    %210 = arith.addf %205, %209 : vector<16x16xf32>
    %c3_108 = arith.constant 3 : index
    %c3_109 = arith.constant 3 : index
    %211 = memref.load %arg2[%c3_108, %c3_109] : memref<4x9xf32, #tpu.memory_space<smem>>
    %212 = vector.extract_strided_slice %194 {offsets = [1, 0], sizes = [16, 16], strides = [1, 1]} : vector<18x18xf32> to vector<16x16xf32>
    %213 = vector.broadcast %211 : f32 to vector<16x16xf32>
    %214 = arith.mulf %212, %213 : vector<16x16xf32>
    %215 = arith.addf %210, %214 : vector<16x16xf32>
    %c3_110 = arith.constant 3 : index
    %c4_111 = arith.constant 4 : index
    %216 = memref.load %arg2[%c3_110, %c4_111] : memref<4x9xf32, #tpu.memory_space<smem>>
    %217 = vector.extract_strided_slice %194 {offsets = [1, 1], sizes = [16, 16], strides = [1, 1]} : vector<18x18xf32> to vector<16x16xf32>
    %218 = vector.broadcast %216 : f32 to vector<16x16xf32>
    %219 = arith.mulf %217, %218 : vector<16x16xf32>
    %220 = arith.addf %215, %219 : vector<16x16xf32>
    %c3_112 = arith.constant 3 : index
    %c5_113 = arith.constant 5 : index
    %221 = memref.load %arg2[%c3_112, %c5_113] : memref<4x9xf32, #tpu.memory_space<smem>>
    %222 = vector.extract_strided_slice %194 {offsets = [1, 2], sizes = [16, 16], strides = [1, 1]} : vector<18x18xf32> to vector<16x16xf32>
    %223 = vector.broadcast %221 : f32 to vector<16x16xf32>
    %224 = arith.mulf %222, %223 : vector<16x16xf32>
    %225 = arith.addf %220, %224 : vector<16x16xf32>
    %c3_114 = arith.constant 3 : index
    %c6_115 = arith.constant 6 : index
    %226 = memref.load %arg2[%c3_114, %c6_115] : memref<4x9xf32, #tpu.memory_space<smem>>
    %227 = vector.extract_strided_slice %194 {offsets = [2, 0], sizes = [16, 16], strides = [1, 1]} : vector<18x18xf32> to vector<16x16xf32>
    %228 = vector.broadcast %226 : f32 to vector<16x16xf32>
    %229 = arith.mulf %227, %228 : vector<16x16xf32>
    %230 = arith.addf %225, %229 : vector<16x16xf32>
    %c3_116 = arith.constant 3 : index
    %c7_117 = arith.constant 7 : index
    %231 = memref.load %arg2[%c3_116, %c7_117] : memref<4x9xf32, #tpu.memory_space<smem>>
    %232 = vector.extract_strided_slice %194 {offsets = [2, 1], sizes = [16, 16], strides = [1, 1]} : vector<18x18xf32> to vector<16x16xf32>
    %233 = vector.broadcast %231 : f32 to vector<16x16xf32>
    %234 = arith.mulf %232, %233 : vector<16x16xf32>
    %235 = arith.addf %230, %234 : vector<16x16xf32>
    %c3_118 = arith.constant 3 : index
    %c8_119 = arith.constant 8 : index
    %236 = memref.load %arg2[%c3_118, %c8_119] : memref<4x9xf32, #tpu.memory_space<smem>>
    %237 = vector.extract_strided_slice %194 {offsets = [2, 2], sizes = [16, 16], strides = [1, 1]} : vector<18x18xf32> to vector<16x16xf32>
    %238 = vector.broadcast %236 : f32 to vector<16x16xf32>
    %239 = arith.mulf %237, %238 : vector<16x16xf32>
    %240 = arith.addf %235, %239 : vector<16x16xf32>
    %cst_120 = arith.constant dense<0.000000e+00> : vector<16xf32>
    %241 = vector.multi_reduction <add>, %240, %cst_120 [0] : vector<16x16xf32> to vector<16xf32>
    %242 = vector.shape_cast %241 : vector<16xf32> to vector<1x16xf32>
    %c0_121 = arith.constant 0 : index
    %c3_122 = arith.constant 3 : index
    %c0_123 = arith.constant 0 : index
    %c0_124 = arith.constant 0 : index
    %243 = vector.load %arg3[%c0_121, %c3_122, %c0_123, %c0_124] : memref<1x4x1x16xf32, #tpu.memory_space<vmem>>, vector<1x1x1x16xf32>
    %244 = vector.shape_cast %243 : vector<1x1x1x16xf32> to vector<1x16xf32>
    %245 = vector.shape_cast %242 : vector<1x16xf32> to vector<1x1x1x16xf32>
    tpu.vector_store %arg3[%c0_121, %c3_122, %c0_123, %c0_124], %245 {strides = array<i32>} : memref<1x4x1x16xf32, #tpu.memory_space<vmem>>, vector<1x1x1x16xf32>,
    %246 = arith.mulf %240, %240 : vector<16x16xf32>
    %cst_125 = arith.constant dense<0.000000e+00> : vector<16xf32>
    %247 = vector.multi_reduction <add>, %246, %cst_125 [0] : vector<16x16xf32> to vector<16xf32>
    %248 = vector.shape_cast %247 : vector<16xf32> to vector<1x16xf32>
    %c0_126 = arith.constant 0 : index
    %c3_127 = arith.constant 3 : index
    %c0_128 = arith.constant 0 : index
    %c0_129 = arith.constant 0 : index
    %249 = vector.load %arg4[%c0_126, %c3_127, %c0_128, %c0_129] : memref<1x4x1x16xf32, #tpu.memory_space<vmem>>, vector<1x1x1x16xf32>
    %250 = vector.shape_cast %249 : vector<1x1x1x16xf32> to vector<1x16xf32>
    %251 = vector.shape_cast %248 : vector<1x16xf32> to vector<1x1x1x16xf32>
    tpu.vector_store %arg4[%c0_126, %c3_127, %c0_128, %c0_129], %251 {strides = array<i32>} : memref<1x4x1x16xf32, #tpu.memory_space<vmem>>, vector<1x1x1x16xf32>,
    return
  }
  func.func @transform_0(%arg0: i32) -> (i32, i32, i32, i32) {
    %c0_i32 = arith.constant 0 : i32
    %c0_i32_0 = arith.constant 0 : i32
    %c0_i32_1 = arith.constant 0 : i32
    %c0_i32_2 = arith.constant 0 : i32
    return %arg0, %c0_i32, %c0_i32_0, %c0_i32_1 : i32, i32, i32, i32
  }
  func.func @transform_1(%arg0: i32) -> (i32, i32) {
    %c0_i32 = arith.constant 0 : i32
    %c0_i32_0 = arith.constant 0 : i32
    %c0_i32_1 = arith.constant 0 : i32
    return %c0_i32, %c0_i32_0 : i32, i32
  }
  func.func @transform_2(%arg0: i32) -> (i32, i32, i32, i32) {
    %c0_i32 = arith.constant 0 : i32
    %c0_i32_0 = arith.constant 0 : i32
    %c0_i32_1 = arith.constant 0 : i32
    %c0_i32_2 = arith.constant 0 : i32
    return %arg0, %c0_i32, %c0_i32_0, %c0_i32_1 : i32, i32, i32, i32
  }
  func.func @transform_3(%arg0: i32) -> (i32, i32, i32, i32) {
    %c0_i32 = arith.constant 0 : i32
    %c0_i32_0 = arith.constant 0 : i32
    %c0_i32_1 = arith.constant 0 : i32
    %c0_i32_2 = arith.constant 0 : i32
    return %arg0, %c0_i32, %c0_i32_0, %c0_i32_1 : i32, i32, i32, i32
  }
}

</mosaic_0001>

<llo_original>
// kernel: tpu_custom_call.1
$region0: #{tpu_custom_call.1}
  #allocation0 [shape = 'u32[]', space=smem, size = 0x4, offset = 0x4, fixed_abs, tag = 'smem constant byte address 0x4 - core index']
  #allocation1 [shape = 'u32[144,128]{1,0:T(1,128)}', space=vmem, size = 0x12000, scoped, tag = 'internal scratch']
  %s0 = inlined_call_operand.hbm [shape: f32[2,4,16,16], index: 0, kind: input, shape index: {}]
  %s1 = inlined_call_operand.hbm [shape: f32[4,9], index: 1, kind: input, shape index: {}]
  %s2 = inlined_call_operand.hbm [shape: f32[2,4,1,16], index: 2, kind: output, shape index: {0}]
  %s3 = inlined_call_operand.hbm [shape: f32[2,4,1,16], index: 3, kind: output, shape index: {1}]
  %4 = xla_tuple %s2, %s3
  %s5 = sld [smem:[#allocation0]]
  $region57: #{tpu_custom_call.1} parent=0
    _
  %s7 = ssub.s32 1, %s5
  %s8 = scalar_select 0, %s7, %s5
  $region1: #{tpu_custom_call.1} parent=0
    #allocation2 [shape = 'u8[65536]{0}', space=vmem, size = 0x10000, scoped, tag = 'input window, operand 0']
    #allocation3 [shape = 's32[2]{0}', space=sflag, size = 0x8, scoped, tag = 'scoped memory for tpu_custom_call.1']
    #allocation4 [shape = 's32[2]{0}', space=sflag, size = 0x8, scoped, tag = 'scoped memory for tpu_custom_call.1']
    #allocation5 [shape = 's32[2]{0}', space=sflag, size = 0x8, scoped, tag = 'scoped memory for tpu_custom_call.1']
    #allocation6 [shape = 'u8[2048]{0}', space=smem, size = 0x800, scoped, tag = 'input window, operand 1, single buffered']
    #allocation7 [shape = 'u8[4096]{0}', space=vmem, size = 0x1000, scoped, tag = 'output window, operand 0']
    #allocation8 [shape = 'u8[4096]{0}', space=vmem, size = 0x1000, scoped, tag = 'output window, operand 1']
    #allocation9 [shape = 's32[2]{0}', space=sflag, size = 0x8, scoped, tag = 'scoped memory for tpu_custom_call.1']
    %9 = vsyncpa [#allocation3], 0
    %s10 = scalar_lea.sflag [#allocation3], 1
    %11 = vsyncpa %s10, 0
    %12 = vsyncpa [#allocation5], 0
    %13 = vsyncpa [#allocation4], 0
    %s14 = scalar_lea.sflag [#allocation4], 1
    %15 = vsyncpa %s14, 0
    %16 = vsyncpa [#allocation9], 0
    %s17 = scalar_lea.sflag [#allocation9], 1
    %18 = vsyncpa %s17, 0
    loop: start=0, step=1, limit=4
    $region2: #{tpu_custom_call.1} parent=1 // loop_pre_header
      _
    $region3: #{tpu_custom_call.1} parent=1 // loop_header
      %s20 = sphi 0, %s24
      %p21 = scmp.ge.s32.totalorder %s20, 4
      %s30 = sphi 0, %s32
      %s33 = sphi 0, %s30
      %s34 = sphi 0, %s33
      %s50 = sphi 0, %s34
      %s54 = sphi 0, %s54
      %s56 = sphi 0, %s54
      %s57 = sphi 0, %s56
      %s71 = sphi 0, %s57
      %s77 = sphi 0, %s79
      %s80 = sphi 0, %s77
      %s81 = sphi 0, %s80
      %s97 = sphi 0, %s81
      %s103 = sphi 0, %s105
      %s106 = sphi 0, %s103
      %s107 = sphi 0, %s106
      %s123 = sphi 0, %s107
    $region4: #{tpu_custom_call.1} parent=1 // loop_header_branch
      %23 = sbr.rel (%p21) target = $region8
    $region5: #{tpu_custom_call.1} parent=1 // loop_body
      %s25 = ssub.s32 %s20, 1
      %s26 = ssub.s32 %s20, 2
      %s27 = sadd.s32 %s20, 1
      %s28 = ssub.s32 %s20, %s27
      %p29 = scmp.eq.s32.totalorder %s28, 0
      %s31 = sadd.s32 %s30, 1
      %s32 = scalar_select %p29, %s30, %s31
      %p35 = pneg %p29
      %p36 = scmp.eq.s32.totalorder %s20, 1
      %p37 = por %p35, %p36
      %p38 = scmp.ne.s32.totalorder %s30, %s33
      %p39 = scmp.eq.s32.totalorder %s20, 0
      %p40 = por %p38, %p39
      %p41 = scmp.ne.s32.totalorder %s30, %s33
      %p42 = scmp.eq.s32.totalorder %s25, 1
      %p43 = por %p41, %p42
      %p44 = scmp.ne.s32.totalorder %s33, %s34
      %p45 = scmp.eq.s32.totalorder %s25, 0
      %p46 = por %p44, %p45
      %p47 = scmp.ne.s32.totalorder %s33, %s34
      %p48 = scmp.eq.s32.totalorder %s26, 1
      %p49 = por %p47, %p48
      %p51 = scmp.ne.s32.totalorder %s34, %s50
      %p52 = scmp.eq.s32.totalorder %s26, 0
      %p53 = por %p51, %p52
      %s55 = sadd.s32 %s54, 1
      %p58 = scmp.eq.s32.totalorder %s20, 1
      %p59 = scmp.ne.s32.totalorder %s54, %s56
      %p60 = scmp.eq.s32.totalorder %s20, 0
      %p61 = por %p59, %p60
      %p62 = scmp.ne.s32.totalorder %s54, %s56
      %p63 = scmp.eq.s32.totalorder %s25, 1
      %p64 = por %p62, %p63
      %p65 = scmp.ne.s32.totalorder %s56, %s57
      %p66 = scmp.eq.s32.totalorder %s25, 0
      %p67 = por %p65, %p66
      %p68 = scmp.ne.s32.totalorder %s56, %s57
      %p69 = scmp.eq.s32.totalorder %s26, 1
      %p70 = por %p68, %p69
      %p72 = scmp.ne.s32.totalorder %s57, %s71
      %p73 = scmp.eq.s32.totalorder %s26, 0
      %p74 = por %p72, %p73
      %s75 = ssub.s32 %s20, %s27
      %p76 = scmp.eq.s32.totalorder %s75, 0
      %s78 = sadd.s32 %s77, 1
      %s79 = scalar_select %p76, %s77, %s78
      %p82 = pneg %p76
      %p83 = scmp.eq.s32.totalorder %s20, 1
      %p84 = por %p82, %p83
      %p85 = scmp.ne.s32.totalorder %s77, %s80
      %p86 = scmp.eq.s32.totalorder %s20, 0
      %p87 = por %p85, %p86
      %p88 = scmp.ne.s32.totalorder %s77, %s80
      %p89 = scmp.eq.s32.totalorder %s25, 1
      %p90 = por %p88, %p89
      %p91 = scmp.ne.s32.totalorder %s80, %s81
      %p92 = scmp.eq.s32.totalorder %s25, 0
      %p93 = por %p91, %p92
      %p94 = scmp.ne.s32.totalorder %s80, %s81
      %p95 = scmp.eq.s32.totalorder %s26, 1
      %p96 = por %p94, %p95
      %p98 = scmp.ne.s32.totalorder %s81, %s97
      %p99 = scmp.eq.s32.totalorder %s26, 0
      %p100 = por %p98, %p99
      %s101 = ssub.s32 %s20, %s27
      %p102 = scmp.eq.s32.totalorder %s101, 0
      %s104 = sadd.s32 %s103, 1
      %s105 = scalar_select %p102, %s103, %s104
      %p108 = pneg %p102
      %p109 = scmp.eq.s32.totalorder %s20, 1
      %p110 = por %p108, %p109
      %p111 = scmp.ne.s32.totalorder %s103, %s106
      %p112 = scmp.eq.s32.totalorder %s20, 0
      %p113 = por %p111, %p112
      %p114 = scmp.ne.s32.totalorder %s103, %s106
      %p115 = scmp.eq.s32.totalorder %s25, 1
      %p116 = por %p114, %p115
      %p117 = scmp.ne.s32.totalorder %s106, %s107
      %p118 = scmp.eq.s32.totalorder %s25, 0
      %p119 = por %p117, %p118
      %p120 = scmp.ne.s32.totalorder %s106, %s107
      %p121 = scmp.eq.s32.totalorder %s26, 1
      %p122 = por %p120, %p121
      %p124 = scmp.ne.s32.totalorder %s107, %s123
      %p125 = scmp.eq.s32.totalorder %s26, 0
      %p126 = por %p124, %p125
      %p127 = scmp.le.s32.totalorder 1, %s20
      %p128 = scmp.lt.s32.totalorder %s20, 3
      %p129 = pnand %p127, %p128
      %p130 = pneg %p129
      // Predicated region
      $region9: #{tpu_custom_call.1} parent=5 // pred_check
        _
      $region10: #{tpu_custom_call.1} parent=5 // pred_check_branch
        %132 = sbr.rel (%p129) target = $region12
      $region11: #{tpu_custom_call.1} parent=5 // pred_region
        %s133 = ssub.s32 %s20, 1
        // Predicated region
        $region13: #{tpu_custom_call.1} parent=11 // pred_check
          %p134 = pneg %p67
        $region14: #{tpu_custom_call.1} parent=11 // pred_check_branch
          %136 = sbr.rel (%p134) target = $region16
        $region15: #{tpu_custom_call.1} parent=11 // pred_region
          %s138 = ssub.s32 64, 64
          %139 = vsyncadd [#allocation5], %s138
          %142 = dma.hbm_to_smem %s1, 64, [#allocation6], [#allocation5]
        $region16: #{tpu_custom_call.1} parent=11 // pred_fallthru
          _
      $region12: #{tpu_custom_call.1} parent=5 // pred_fallthru
        _
      %p143 = scmp.lt.s32.totalorder %s20, 2
      // Predicated region
      $region17: #{tpu_custom_call.1} parent=5 // pred_check
        %p144 = pneg %p143
      $region18: #{tpu_custom_call.1} parent=5 // pred_check_branch
        %146 = sbr.rel (%p144) target = $region20
      $region19: #{tpu_custom_call.1} parent=5 // pred_region
        // Predicated region
        $region21: #{tpu_custom_call.1} parent=19 // pred_check
          %p147 = pneg %p40
        $region22: #{tpu_custom_call.1} parent=19 // pred_check_branch
          %149 = sbr.rel (%p147) target = $region24
        $region23: #{tpu_custom_call.1} parent=19 // pred_region
          %s150 = sand.u32 %s30, 1
          %s151 = scalar_lea.sflag [#allocation3], %s150
          %s152 = sand.u32 %s30, 1
          %s153 = smul.addr %s152, 64
          %s154 = scalar_lea.vmem [#allocation2], %s153
          %s156 = ssub.s32 1024, 1024
          %157 = vsyncadd %s151, %s156
          %s158 = smul.addr %s20, 8
          %s159 = smul.addr %s158, 128
          %s160 = scalar_lea.hbm %s0, %s159
          %s161 = sshll.u32 %s154, 4
          %s162 = int_to_ptr.vmem [resolvable:$true] %s161
          %167 = dma.hbm_to_vmem [thread:$0]  %s160, 1024, %s162, %s151, 128, 128, 8
        $region24: #{tpu_custom_call.1} parent=19 // pred_fallthru
          _
      $region20: #{tpu_custom_call.1} parent=5 // pred_fallthru
        _
      %p168 = scmp.le.s32.totalorder 1, %s20
      %p169 = scmp.lt.s32.totalorder %s20, 3
      %p170 = pnand %p168, %p169
      %p171 = pneg %p170
      // Predicated region
      $region25: #{tpu_custom_call.1} parent=5 // pred_check
        _
      $region26: #{tpu_custom_call.1} parent=5 // pred_check_branch
        %173 = sbr.rel (%p170) target = $region28
      $region27: #{tpu_custom_call.1} parent=5 // pred_region
        %s174 = ssub.s32 %s20, 1
        %s175 = sand.u32 %s33, 1
        %s176 = scalar_lea.sflag [#allocation3], %s175
        %s177 = sand.u32 %s33, 1
        %s178 = smul.addr %s177, 64
        %s179 = scalar_lea.vmem [#allocation2], %s178
        // Predicated region
        $region29: #{tpu_custom_call.1} parent=27 // pred_check
          %p180 = pneg %p46
        $region30: #{tpu_custom_call.1} parent=27 // pred_check_branch
          %182 = sbr.rel (%p180) target = $region32
        $region31: #{tpu_custom_call.1} parent=27 // pred_region
          %183 = dma.done %s176, 1024
        $region32: #{tpu_custom_call.1} parent=27 // pred_fallthru
          _
        // Predicated region
        $region33: #{tpu_custom_call.1} parent=27 // pred_check
          %p184 = pneg %p67
        $region34: #{tpu_custom_call.1} parent=27 // pred_check_branch
          %186 = sbr.rel (%p184) target = $region36
        $region35: #{tpu_custom_call.1} parent=27 // pred_region
          %187 = dma.done [#allocation5], 64
        $region36: #{tpu_custom_call.1} parent=27 // pred_fallthru
          _
        %188 = sfence
        %s189 = sand.u32 %s33, 1
        %s190 = scalar_lea.sflag [#allocation3], %s189
        %s191 = sand.u32 %s33, 1
        %s192 = smul.addr %s191, 64
        %s193 = scalar_lea.vmem [#allocation2], %s192
        %p194 = pneg %p46
        %p195 = pneg %p43
        %p196 = pneg %p67
        %p197 = pneg %p64
        %p198 = pneg %p93
        %p199 = pneg %p90
        %s200 = sand.u32 %s80, 1
        %s201 = scalar_lea.sflag [#allocation4], %s200
        %s202 = sand.u32 %s80, 1
        %s203 = smul.addr %s202, 4
        %s204 = scalar_lea.vmem [#allocation7], %s203
        %p205 = pneg %p119
        %p206 = pneg %p116
        %s207 = sand.u32 %s106, 1
        %s208 = scalar_lea.sflag [#allocation9], %s207
        %s209 = sand.u32 %s106, 1
        %s210 = smul.addr %s209, 4
        %s211 = scalar_lea.vmem [#allocation8], %s210
        %v212 = vld [vmem:[%s179] sm:$0xff]
        %v213 = vld [vmem:[%s179 + $0x8] sm:$0xff]
        %vm216 = vcmask 1040384
        %v217 = vrot.slane %v212, 7
        %v218 = vrot.slane %v213, 7
        %v219 = vsel %vm216, %v217, %v218
        %v222 = vsel %vm216, 0.0, %v217
        %v223 = vsel %vm216, %v218, 0.0
        %226 = vrot.lane.b32.xlu0 %v222, 1
        %v227 = vpop.permute.xlu0 %226
        %228 = vrot.lane.b32.xlu0 %v219, 1
        %v229 = vpop.permute.xlu0 %228
        %230 = vrot.lane.b32.xlu0 %v223, 1
        %v231 = vpop.permute.xlu0 %230
        %vm235 = vcmask 7168
        %v236 = vsel %vm235, 0.0, %v227
        %v237 = vsel %vm235, 0.0, %v229
        %v238 = vsel %vm235, 0.0, %v231
        %vm239 = vcmask 138240
        %v240 = vsel %vm239, %v236, 0.0
        %v241 = vsel %vm239, %v237, 0.0
        %v242 = vsel %vm239, %v238, 0.0
        %s243 = sld [smem:[#allocation6]]
        %v244 = vstv %s243
        %v245 = vmul.f32 %v240, %v244
        %v246 = vmul.f32 %v241, %v244
        %v247 = vadd.f32 %v245, 0.0
        %v248 = vadd.f32 %v246, 0.0
        %s249 = sld [smem:[#allocation6 + $0x1]]
        %v250 = vstv %s249
        %v251 = vmul.f32 %v240, %v250
        %v252 = vmul.f32 %v241, %v250
        %255 = vrot.lane.b32.xlu0 %v251, 127
        %v256 = vpop.permute.xlu0 %255
        %257 = vrot.lane.b32.xlu0 %v252, 127
        %v258 = vpop.permute.xlu0 %257
        %v261 = vadd.f32 %v247, %v256
        %v262 = vadd.f32 %v248, %v258
        %s263 = sld [smem:[#allocation6 + $0x2]]
        %v264 = vstv %s263
        %v265 = vmul.f32 %v240, %v264
        %v266 = vmul.f32 %v241, %v264
        %269 = vrot.lane.b32.xlu0 %v265, 126
        %v270 = vpop.permute.xlu0 %269
        %271 = vrot.lane.b32.xlu0 %v266, 126
        %v272 = vpop.permute.xlu0 %271
        %v275 = vadd.f32 %v261, %v270
        %v276 = vadd.f32 %v262, %v272
        %s277 = sld [smem:[#allocation6 + $0x3]]
        %v278 = vstv %s277
        %v279 = vmul.f32 %v240, %v278
        %v280 = vmul.f32 %v241, %v278
        %v281 = vmul.f32 %v242, %v278
        %vm285 = vcmask 1046528
        %v286 = vrot.slane %v279, 1
        %v287 = vrot.slane %v280, 1
        %v288 = vsel %vm285, %v286, %v287
        %v289 = vrot.slane %v281, 1
        %v290 = vsel %vm285, %v287, %v289
        %v293 = vadd.f32 %v275, %v288
        %v294 = vadd.f32 %v276, %v290
        %s295 = sld [smem:[#allocation6 + $0x4]]
        %v296 = vstv %s295
        %v297 = vmul.f32 %v240, %v296
        %v298 = vmul.f32 %v241, %v296
        %v299 = vmul.f32 %v242, %v296
        %v303 = vrot.slane %v297, 1
        %v304 = vrot.slane %v298, 1
        %v305 = vsel %vm285, %v303, %v304
        %v306 = vrot.slane %v299, 1
        %v307 = vsel %vm285, %v304, %v306
        %308 = vrot.lane.b32.xlu0 %v305, 127
        %v309 = vpop.permute.xlu0 %308
        %310 = vrot.lane.b32.xlu0 %v307, 127
        %v311 = vpop.permute.xlu0 %310
        %v314 = vadd.f32 %v293, %v309
        %v315 = vadd.f32 %v294, %v311
        %s316 = sld [smem:[#allocation6 + $0x5]]
        %v317 = vstv %s316
        %v318 = vmul.f32 %v240, %v317
        %v319 = vmul.f32 %v241, %v317
        %v320 = vmul.f32 %v242, %v317
        %v324 = vrot.slane %v318, 1
        %v325 = vrot.slane %v319, 1
        %v326 = vsel %vm285, %v324, %v325
        %v327 = vrot.slane %v320, 1
        %v328 = vsel %vm285, %v325, %v327
        %329 = vrot.lane.b32.xlu0 %v326, 126
        %v330 = vpop.permute.xlu0 %329
        %331 = vrot.lane.b32.xlu0 %v328, 126
        %v332 = vpop.permute.xlu0 %331
        %v335 = vadd.f32 %v314, %v330
        %v336 = vadd.f32 %v315, %v332
        %s337 = sld [smem:[#allocation6 + $0x6]]
        %v338 = vstv %s337
        %v339 = vmul.f32 %v240, %v338
        %v340 = vmul.f32 %v241, %v338
        %v341 = vmul.f32 %v242, %v338
        %vm345 = vcmask 1045504
        %v346 = vrot.slane %v339, 2
        %v347 = vrot.slane %v340, 2
        %v348 = vsel %vm345, %v346, %v347
        %v349 = vrot.slane %v341, 2
        %v350 = vsel %vm345, %v347, %v349
        %v353 = vadd.f32 %v335, %v348
        %v354 = vadd.f32 %v336, %v350
        %s355 = sld [smem:[#allocation6 + $0x7]]
        %v356 = vstv %s355
        %v357 = vmul.f32 %v240, %v356
        %v358 = vmul.f32 %v241, %v356
        %v359 = vmul.f32 %v242, %v356
        %v363 = vrot.slane %v357, 2
        %v364 = vrot.slane %v358, 2
        %v365 = vsel %vm345, %v363, %v364
        %v366 = vrot.slane %v359, 2
        %v367 = vsel %vm345, %v364, %v366
        %368 = vrot.lane.b32.xlu0 %v365, 127
        %v369 = vpop.permute.xlu0 %368
        %370 = vrot.lane.b32.xlu0 %v367, 127
        %v371 = vpop.permute.xlu0 %370
        %v374 = vadd.f32 %v353, %v369
        %v375 = vadd.f32 %v354, %v371
        %s376 = sld [smem:[#allocation6 + $0x8]]
        %v377 = vstv %s376
        %v378 = vmul.f32 %v240, %v377
        %v379 = vmul.f32 %v241, %v377
        %v380 = vmul.f32 %v242, %v377
        %v384 = vrot.slane %v378, 2
        %v385 = vrot.slane %v379, 2
        %v386 = vsel %vm345, %v384, %v385
        %v387 = vrot.slane %v380, 2
        %v388 = vsel %vm345, %v385, %v387
        %389 = vrot.lane.b32.xlu0 %v386, 126
        %v390 = vpop.permute.xlu0 %389
        %391 = vrot.lane.b32.xlu0 %v388, 126
        %v392 = vpop.permute.xlu0 %391
        %v395 = vadd.f32 %v374, %v390
        %v396 = vadd.f32 %v375, %v392
        %vm397 = vcmask 130048
        %v398 = vsel %vm397, %v395, 0.0
        %v399 = vsel %vm397, %v396, 0.0
        %v400 = vadd.f32 %v398, %v399
        %v401 = vrot.slane %v400, 4
        %v402 = vadd.f32 %v400, %v401
        %v403 = vrot.slane %v402, 2
        %v404 = vadd.f32 %v402, %v403
        %v405 = vrot.slane %v404, 1
        %v406 = vadd.f32 %v404, %v405
        %vm407 = vcmask 122880
        %408 = vst.msk [vmem:[%s204] sm:$0x1] %vm407, %v406
        %v409 = vmul.f32 %v395, %v395
        %v410 = vmul.f32 %v396, %v396
        %v411 = vsel %vm397, %v409, 0.0
        %v412 = vsel %vm397, %v410, 0.0
        %v413 = vadd.f32 %v411, %v412
        %v414 = vrot.slane %v413, 4
        %v415 = vadd.f32 %v413, %v414
        %v416 = vrot.slane %v415, 2
        %v417 = vadd.f32 %v415, %v416
        %v418 = vrot.slane %v417, 1
        %v419 = vadd.f32 %v417, %v418
        %420 = vst.msk [vmem:[%s211] sm:$0x1] %vm407, %v419
        %s421 = scalar_lea.vmem %s179, 16 [#allocation2]
        %v422 = vld [vmem:[%s421] sm:$0xff]
        %v423 = vld [vmem:[%s421 + $0x8] sm:$0xff]
        %v426 = vrot.slane %v422, 7
        %v427 = vrot.slane %v423, 7
        %v428 = vsel %vm216, %v426, %v427
        %v431 = vsel %vm216, 0.0, %v426
        %v432 = vsel %vm216, %v427, 0.0
        %435 = vrot.lane.b32.xlu0 %v431, 1
        %v436 = vpop.permute.xlu0 %435
        %437 = vrot.lane.b32.xlu0 %v428, 1
        %v438 = vpop.permute.xlu0 %437
        %439 = vrot.lane.b32.xlu0 %v432, 1
        %v440 = vpop.permute.xlu0 %439
        %v444 = vsel %vm235, 0.0, %v436
        %v445 = vsel %vm235, 0.0, %v438
        %v446 = vsel %vm235, 0.0, %v440
        %v447 = vsel %vm239, %v444, 0.0
        %v448 = vsel %vm239, %v445, 0.0
        %v449 = vsel %vm239, %v446, 0.0
        %s450 = sld [smem:[#allocation6 + $0x80]]
        %v451 = vstv %s450
        %v452 = vmul.f32 %v447, %v451
        %v453 = vmul.f32 %v448, %v451
        %v454 = vadd.f32 %v452, 0.0
        %v455 = vadd.f32 %v453, 0.0
        %s456 = sld [smem:[#allocation6 + $0x81]]
        %v457 = vstv %s456
        %v458 = vmul.f32 %v447, %v457
        %v459 = vmul.f32 %v448, %v457
        %462 = vrot.lane.b32.xlu0 %v458, 127
        %v463 = vpop.permute.xlu0 %462
        %464 = vrot.lane.b32.xlu0 %v459, 127
        %v465 = vpop.permute.xlu0 %464
        %v468 = vadd.f32 %v454, %v463
        %v469 = vadd.f32 %v455, %v465
        %s470 = sld [smem:[#allocation6 + $0x82]]
        %v471 = vstv %s470
        %v472 = vmul.f32 %v447, %v471
        %v473 = vmul.f32 %v448, %v471
        %476 = vrot.lane.b32.xlu0 %v472, 126
        %v477 = vpop.permute.xlu0 %476
        %478 = vrot.lane.b32.xlu0 %v473, 126
        %v479 = vpop.permute.xlu0 %478
        %v482 = vadd.f32 %v468, %v477
        %v483 = vadd.f32 %v469, %v479
        %s484 = sld [smem:[#allocation6 + $0x83]]
        %v485 = vstv %s484
        %v486 = vmul.f32 %v447, %v485
        %v487 = vmul.f32 %v448, %v485
        %v488 = vmul.f32 %v449, %v485
        %v492 = vrot.slane %v486, 1
        %v493 = vrot.slane %v487, 1
        %v494 = vsel %vm285, %v492, %v493
        %v495 = vrot.slane %v488, 1
        %v496 = vsel %vm285, %v493, %v495
        %v499 = vadd.f32 %v482, %v494
        %v500 = vadd.f32 %v483, %v496
        %s501 = sld [smem:[#allocation6 + $0x84]]
        %v502 = vstv %s501
        %v503 = vmul.f32 %v447, %v502
        %v504 = vmul.f32 %v448, %v502
        %v505 = vmul.f32 %v449, %v502
        %v509 = vrot.slane %v503, 1
        %v510 = vrot.slane %v504, 1
        %v511 = vsel %vm285, %v509, %v510
        %v512 = vrot.slane %v505, 1
        %v513 = vsel %vm285, %v510, %v512
        %514 = vrot.lane.b32.xlu0 %v511, 127
        %v515 = vpop.permute.xlu0 %514
        %516 = vrot.lane.b32.xlu0 %v513, 127
        %v517 = vpop.permute.xlu0 %516
        %v520 = vadd.f32 %v499, %v515
        %v521 = vadd.f32 %v500, %v517
        %s522 = sld [smem:[#allocation6 + $0x85]]
        %v523 = vstv %s522
        %v524 = vmul.f32 %v447, %v523
        %v525 = vmul.f32 %v448, %v523
        %v526 = vmul.f32 %v449, %v523
        %v530 = vrot.slane %v524, 1
        %v531 = vrot.slane %v525, 1
        %v532 = vsel %vm285, %v530, %v531
        %v533 = vrot.slane %v526, 1
        %v534 = vsel %vm285, %v531, %v533
        %535 = vrot.lane.b32.xlu0 %v532, 126
        %v536 = vpop.permute.xlu0 %535
        %537 = vrot.lane.b32.xlu0 %v534, 126
        %v538 = vpop.permute.xlu0 %537
        %v541 = vadd.f32 %v520, %v536
        %v542 = vadd.f32 %v521, %v538
        %s543 = sld [smem:[#allocation6 + $0x86]]
        %v544 = vstv %s543
        %v545 = vmul.f32 %v447, %v544
        %v546 = vmul.f32 %v448, %v544
        %v547 = vmul.f32 %v449, %v544
        %v551 = vrot.slane %v545, 2
        %v552 = vrot.slane %v546, 2
        %v553 = vsel %vm345, %v551, %v552
        %v554 = vrot.slane %v547, 2
        %v555 = vsel %vm345, %v552, %v554
        %v558 = vadd.f32 %v541, %v553
        %v559 = vadd.f32 %v542, %v555
        %s560 = sld [smem:[#allocation6 + $0x87]]
        %v561 = vstv %s560
        %v562 = vmul.f32 %v447, %v561
        %v563 = vmul.f32 %v448, %v561
        %v564 = vmul.f32 %v449, %v561
        %v568 = vrot.slane %v562, 2
        %v569 = vrot.slane %v563, 2
        %v570 = vsel %vm345, %v568, %v569
        %v571 = vrot.slane %v564, 2
        %v572 = vsel %vm345, %v569, %v571
        %573 = vrot.lane.b32.xlu0 %v570, 127
        %v574 = vpop.permute.xlu0 %573
        %575 = vrot.lane.b32.xlu0 %v572, 127
        %v576 = vpop.permute.xlu0 %575
        %v579 = vadd.f32 %v558, %v574
        %v580 = vadd.f32 %v559, %v576
        %s581 = sld [smem:[#allocation6 + $0x88]]
        %v582 = vstv %s581
        %v583 = vmul.f32 %v447, %v582
        %v584 = vmul.f32 %v448, %v582
        %v585 = vmul.f32 %v449, %v582
        %v589 = vrot.slane %v583, 2
        %v590 = vrot.slane %v584, 2
        %v591 = vsel %vm345, %v589, %v590
        %v592 = vrot.slane %v585, 2
        %v593 = vsel %vm345, %v590, %v592
        %594 = vrot.lane.b32.xlu0 %v591, 126
        %v595 = vpop.permute.xlu0 %594
        %596 = vrot.lane.b32.xlu0 %v593, 126
        %v597 = vpop.permute.xlu0 %596
        %v600 = vadd.f32 %v579, %v595
        %v601 = vadd.f32 %v580, %v597
        %v602 = vsel %vm397, %v600, 0.0
        %v603 = vsel %vm397, %v601, 0.0
        %v604 = vadd.f32 %v602, %v603
        %v605 = vrot.slane %v604, 4
        %v606 = vadd.f32 %v604, %v605
        %v607 = vrot.slane %v606, 2
        %v608 = vadd.f32 %v606, %v607
        %v609 = vrot.slane %v608, 1
        %v610 = vadd.f32 %v608, %v609
        %s611 = scalar_lea.vmem %s204, 1 [#allocation7]
        %612 = vst.msk [vmem:[%s611] sm:$0x1] %vm407, %v610
        %v613 = vmul.f32 %v600, %v600
        %v614 = vmul.f32 %v601, %v601
        %v615 = vsel %vm397, %v613, 0.0
        %v616 = vsel %vm397, %v614, 0.0
        %v617 = vadd.f32 %v615, %v616
        %v618 = vrot.slane %v617, 4
        %v619 = vadd.f32 %v617, %v618
        %v620 = vrot.slane %v619, 2
        %v621 = vadd.f32 %v619, %v620
        %v622 = vrot.slane %v621, 1
        %v623 = vadd.f32 %v621, %v622
        %s624 = scalar_lea.vmem %s211, 1 [#allocation8]
        %625 = vst.msk [vmem:[%s624] sm:$0x1] %vm407, %v623
        %s626 = scalar_lea.vmem %s179, 32 [#allocation2]
        %v627 = vld [vmem:[%s626] sm:$0xff]
        %v628 = vld [vmem:[%s626 + $0x8] sm:$0xff]
        %v631 = vrot.slane %v627, 7
        %v632 = vrot.slane %v628, 7
        %v633 = vsel %vm216, %v631, %v632
        %v636 = vsel %vm216, 0.0, %v631
        %v637 = vsel %vm216, %v632, 0.0
        %640 = vrot.lane.b32.xlu0 %v636, 1
        %v641 = vpop.permute.xlu0 %640
        %642 = vrot.lane.b32.xlu0 %v633, 1
        %v643 = vpop.permute.xlu0 %642
        %644 = vrot.lane.b32.xlu0 %v637, 1
        %v645 = vpop.permute.xlu0 %644
        %v649 = vsel %vm235, 0.0, %v641
        %v650 = vsel %vm235, 0.0, %v643
        %v651 = vsel %vm235, 0.0, %v645
        %v652 = vsel %vm239, %v649, 0.0
        %v653 = vsel %vm239, %v650, 0.0
        %v654 = vsel %vm239, %v651, 0.0
        %s655 = sld [smem:[#allocation6 + $0x100]]
        %v656 = vstv %s655
        %v657 = vmul.f32 %v652, %v656
        %v658 = vmul.f32 %v653, %v656
        %v659 = vadd.f32 %v657, 0.0
        %v660 = vadd.f32 %v658, 0.0
        %s661 = sld [smem:[#allocation6 + $0x101]]
        %v662 = vstv %s661
        %v663 = vmul.f32 %v652, %v662
        %v664 = vmul.f32 %v653, %v662
        %667 = vrot.lane.b32.xlu0 %v663, 127
        %v668 = vpop.permute.xlu0 %667
        %669 = vrot.lane.b32.xlu0 %v664, 127
        %v670 = vpop.permute.xlu0 %669
        %v673 = vadd.f32 %v659, %v668
        %v674 = vadd.f32 %v660, %v670
        %s675 = sld [smem:[#allocation6 + $0x102]]
        %v676 = vstv %s675
        %v677 = vmul.f32 %v652, %v676
        %v678 = vmul.f32 %v653, %v676
        %681 = vrot.lane.b32.xlu0 %v677, 126
        %v682 = vpop.permute.xlu0 %681
        %683 = vrot.lane.b32.xlu0 %v678, 126
        %v684 = vpop.permute.xlu0 %683
        %v687 = vadd.f32 %v673, %v682
        %v688 = vadd.f32 %v674, %v684
        %s689 = sld [smem:[#allocation6 + $0x103]]
        %v690 = vstv %s689
        %v691 = vmul.f32 %v652, %v690
        %v692 = vmul.f32 %v653, %v690
        %v693 = vmul.f32 %v654, %v690
        %v697 = vrot.slane %v691, 1
        %v698 = vrot.slane %v692, 1
        %v699 = vsel %vm285, %v697, %v698
        %v700 = vrot.slane %v693, 1
        %v701 = vsel %vm285, %v698, %v700
        %v704 = vadd.f32 %v687, %v699
        %v705 = vadd.f32 %v688, %v701
        %s706 = sld [smem:[#allocation6 + $0x104]]
        %v707 = vstv %s706
        %v708 = vmul.f32 %v652, %v707
        %v709 = vmul.f32 %v653, %v707
        %v710 = vmul.f32 %v654, %v707
        %v714 = vrot.slane %v708, 1
        %v715 = vrot.slane %v709, 1
        %v716 = vsel %vm285, %v714, %v715
        %v717 = vrot.slane %v710, 1
        %v718 = vsel %vm285, %v715, %v717
        %719 = vrot.lane.b32.xlu0 %v716, 127
        %v720 = vpop.permute.xlu0 %719
        %721 = vrot.lane.b32.xlu0 %v718, 127
        %v722 = vpop.permute.xlu0 %721
        %v725 = vadd.f32 %v704, %v720
        %v726 = vadd.f32 %v705, %v722
        %s727 = sld [smem:[#allocation6 + $0x105]]
        %v728 = vstv %s727
        %v729 = vmul.f32 %v652, %v728
        %v730 = vmul.f32 %v653, %v728
        %v731 = vmul.f32 %v654, %v728
        %v735 = vrot.slane %v729, 1
        %v736 = vrot.slane %v730, 1
        %v737 = vsel %vm285, %v735, %v736
        %v738 = vrot.slane %v731, 1
        %v739 = vsel %vm285, %v736, %v738
        %740 = vrot.lane.b32.xlu0 %v737, 126
        %v741 = vpop.permute.xlu0 %740
        %742 = vrot.lane.b32.xlu0 %v739, 126
        %v743 = vpop.permute.xlu0 %742
        %v746 = vadd.f32 %v725, %v741
        %v747 = vadd.f32 %v726, %v743
        %s748 = sld [smem:[#allocation6 + $0x106]]
        %v749 = vstv %s748
        %v750 = vmul.f32 %v652, %v749
        %v751 = vmul.f32 %v653, %v749
        %v752 = vmul.f32 %v654, %v749
        %v756 = vrot.slane %v750, 2
        %v757 = vrot.slane %v751, 2
        %v758 = vsel %vm345, %v756, %v757
        %v759 = vrot.slane %v752, 2
        %v760 = vsel %vm345, %v757, %v759
        %v763 = vadd.f32 %v746, %v758
        %v764 = vadd.f32 %v747, %v760
        %s765 = sld [smem:[#allocation6 + $0x107]]
        %v766 = vstv %s765
        %v767 = vmul.f32 %v652, %v766
        %v768 = vmul.f32 %v653, %v766
        %v769 = vmul.f32 %v654, %v766
        %v773 = vrot.slane %v767, 2
        %v774 = vrot.slane %v768, 2
        %v775 = vsel %vm345, %v773, %v774
        %v776 = vrot.slane %v769, 2
        %v777 = vsel %vm345, %v774, %v776
        %778 = vrot.lane.b32.xlu0 %v775, 127
        %v779 = vpop.permute.xlu0 %778
        %780 = vrot.lane.b32.xlu0 %v777, 127
        %v781 = vpop.permute.xlu0 %780
        %v784 = vadd.f32 %v763, %v779
        %v785 = vadd.f32 %v764, %v781
        %s786 = sld [smem:[#allocation6 + $0x108]]
        %v787 = vstv %s786
        %v788 = vmul.f32 %v652, %v787
        %v789 = vmul.f32 %v653, %v787
        %v790 = vmul.f32 %v654, %v787
        %v794 = vrot.slane %v788, 2
        %v795 = vrot.slane %v789, 2
        %v796 = vsel %vm345, %v794, %v795
        %v797 = vrot.slane %v790, 2
        %v798 = vsel %vm345, %v795, %v797
        %799 = vrot.lane.b32.xlu0 %v796, 126
        %v800 = vpop.permute.xlu0 %799
        %801 = vrot.lane.b32.xlu0 %v798, 126
        %v802 = vpop.permute.xlu0 %801
        %v805 = vadd.f32 %v784, %v800
        %v806 = vadd.f32 %v785, %v802
        %v807 = vsel %vm397, %v805, 0.0
        %v808 = vsel %vm397, %v806, 0.0
        %v809 = vadd.f32 %v807, %v808
        %v810 = vrot.slane %v809, 4
        %v811 = vadd.f32 %v809, %v810
        %v812 = vrot.slane %v811, 2
        %v813 = vadd.f32 %v811, %v812
        %v814 = vrot.slane %v813, 1
        %v815 = vadd.f32 %v813, %v814
        %s816 = scalar_lea.vmem %s204, 2 [#allocation7]
        %817 = vst.msk [vmem:[%s816] sm:$0x1] %vm407, %v815
        %v818 = vmul.f32 %v805, %v805
        %v819 = vmul.f32 %v806, %v806
        %v820 = vsel %vm397, %v818, 0.0
        %v821 = vsel %vm397, %v819, 0.0
        %v822 = vadd.f32 %v820, %v821
        %v823 = vrot.slane %v822, 4
        %v824 = vadd.f32 %v822, %v823
        %v825 = vrot.slane %v824, 2
        %v826 = vadd.f32 %v824, %v825
        %v827 = vrot.slane %v826, 1
        %v828 = vadd.f32 %v826, %v827
        %s829 = scalar_lea.vmem %s211, 2 [#allocation8]
        %830 = vst.msk [vmem:[%s829] sm:$0x1] %vm407, %v828
        %s831 = scalar_lea.vmem %s179, 48 [#allocation2]
        %v832 = vld [vmem:[%s831] sm:$0xff]
        %v833 = vld [vmem:[%s831 + $0x8] sm:$0xff]
        %v836 = vrot.slane %v832, 7
        %v837 = vrot.slane %v833, 7
        %v838 = vsel %vm216, %v836, %v837
        %v841 = vsel %vm216, 0.0, %v836
        %v842 = vsel %vm216, %v837, 0.0
        %845 = vrot.lane.b32.xlu0 %v841, 1
        %v846 = vpop.permute.xlu0 %845
        %847 = vrot.lane.b32.xlu0 %v838, 1
        %v848 = vpop.permute.xlu0 %847
        %849 = vrot.lane.b32.xlu0 %v842, 1
        %v850 = vpop.permute.xlu0 %849
        %v854 = vsel %vm235, 0.0, %v846
        %v855 = vsel %vm235, 0.0, %v848
        %v856 = vsel %vm235, 0.0, %v850
        %v857 = vsel %vm239, %v854, 0.0
        %v858 = vsel %vm239, %v855, 0.0
        %v859 = vsel %vm239, %v856, 0.0
        %s860 = sld [smem:[#allocation6 + $0x180]]
        %v861 = vstv %s860
        %v862 = vmul.f32 %v857, %v861
        %v863 = vmul.f32 %v858, %v861
        %v864 = vadd.f32 %v862, 0.0
        %v865 = vadd.f32 %v863, 0.0
        %s866 = sld [smem:[#allocation6 + $0x181]]
        %v867 = vstv %s866
        %v868 = vmul.f32 %v857, %v867
        %v869 = vmul.f32 %v858, %v867
        %872 = vrot.lane.b32.xlu0 %v868, 127
        %v873 = vpop.permute.xlu0 %872
        %874 = vrot.lane.b32.xlu0 %v869, 127
        %v875 = vpop.permute.xlu0 %874
        %v878 = vadd.f32 %v864, %v873
        %v879 = vadd.f32 %v865, %v875
        %s880 = sld [smem:[#allocation6 + $0x182]]
        %v881 = vstv %s880
        %v882 = vmul.f32 %v857, %v881
        %v883 = vmul.f32 %v858, %v881
        %886 = vrot.lane.b32.xlu0 %v882, 126
        %v887 = vpop.permute.xlu0 %886
        %888 = vrot.lane.b32.xlu0 %v883, 126
        %v889 = vpop.permute.xlu0 %888
        %v892 = vadd.f32 %v878, %v887
        %v893 = vadd.f32 %v879, %v889
        %s894 = sld [smem:[#allocation6 + $0x183]]
        %v895 = vstv %s894
        %v896 = vmul.f32 %v857, %v895
        %v897 = vmul.f32 %v858, %v895
        %v898 = vmul.f32 %v859, %v895
        %v902 = vrot.slane %v896, 1
        %v903 = vrot.slane %v897, 1
        %v904 = vsel %vm285, %v902, %v903
        %v905 = vrot.slane %v898, 1
        %v906 = vsel %vm285, %v903, %v905
        %v909 = vadd.f32 %v892, %v904
        %v910 = vadd.f32 %v893, %v906
        %s911 = sld [smem:[#allocation6 + $0x184]]
        %v912 = vstv %s911
        %v913 = vmul.f32 %v857, %v912
        %v914 = vmul.f32 %v858, %v912
        %v915 = vmul.f32 %v859, %v912
        %v919 = vrot.slane %v913, 1
        %v920 = vrot.slane %v914, 1
        %v921 = vsel %vm285, %v919, %v920
        %v922 = vrot.slane %v915, 1
        %v923 = vsel %vm285, %v920, %v922
        %924 = vrot.lane.b32.xlu0 %v921, 127
        %v925 = vpop.permute.xlu0 %924
        %926 = vrot.lane.b32.xlu0 %v923, 127
        %v927 = vpop.permute.xlu0 %926
        %v930 = vadd.f32 %v909, %v925
        %v931 = vadd.f32 %v910, %v927
        %s932 = sld [smem:[#allocation6 + $0x185]]
        %v933 = vstv %s932
        %v934 = vmul.f32 %v857, %v933
        %v935 = vmul.f32 %v858, %v933
        %v936 = vmul.f32 %v859, %v933
        %v940 = vrot.slane %v934, 1
        %v941 = vrot.slane %v935, 1
        %v942 = vsel %vm285, %v940, %v941
        %v943 = vrot.slane %v936, 1
        %v944 = vsel %vm285, %v941, %v943
        %945 = vrot.lane.b32.xlu0 %v942, 126
        %v946 = vpop.permute.xlu0 %945
        %947 = vrot.lane.b32.xlu0 %v944, 126
        %v948 = vpop.permute.xlu0 %947
        %v951 = vadd.f32 %v930, %v946
        %v952 = vadd.f32 %v931, %v948
        %s953 = sld [smem:[#allocation6 + $0x186]]
        %v954 = vstv %s953
        %v955 = vmul.f32 %v857, %v954
        %v956 = vmul.f32 %v858, %v954
        %v957 = vmul.f32 %v859, %v954
        %v961 = vrot.slane %v955, 2
        %v962 = vrot.slane %v956, 2
        %v963 = vsel %vm345, %v961, %v962
        %v964 = vrot.slane %v957, 2
        %v965 = vsel %vm345, %v962, %v964
        %v968 = vadd.f32 %v951, %v963
        %v969 = vadd.f32 %v952, %v965
        %s970 = sld [smem:[#allocation6 + $0x187]]
        %v971 = vstv %s970
        %v972 = vmul.f32 %v857, %v971
        %v973 = vmul.f32 %v858, %v971
        %v974 = vmul.f32 %v859, %v971
        %v978 = vrot.slane %v972, 2
        %v979 = vrot.slane %v973, 2
        %v980 = vsel %vm345, %v978, %v979
        %v981 = vrot.slane %v974, 2
        %v982 = vsel %vm345, %v979, %v981
        %983 = vrot.lane.b32.xlu0 %v980, 127
        %v984 = vpop.permute.xlu0 %983
        %985 = vrot.lane.b32.xlu0 %v982, 127
        %v986 = vpop.permute.xlu0 %985
        %v989 = vadd.f32 %v968, %v984
        %v990 = vadd.f32 %v969, %v986
        %s991 = sld [smem:[#allocation6 + $0x188]]
        %v992 = vstv %s991
        %v993 = vmul.f32 %v857, %v992
        %v994 = vmul.f32 %v858, %v992
        %v995 = vmul.f32 %v859, %v992
        %v999 = vrot.slane %v993, 2
        %v1000 = vrot.slane %v994, 2
        %v1001 = vsel %vm345, %v999, %v1000
        %v1002 = vrot.slane %v995, 2
        %v1003 = vsel %vm345, %v1000, %v1002
        %1004 = vrot.lane.b32.xlu0 %v1001, 126
        %v1005 = vpop.permute.xlu0 %1004
        %1006 = vrot.lane.b32.xlu0 %v1003, 126
        %v1007 = vpop.permute.xlu0 %1006
        %v1010 = vadd.f32 %v989, %v1005
        %v1011 = vadd.f32 %v990, %v1007
        %v1012 = vsel %vm397, %v1010, 0.0
        %v1013 = vsel %vm397, %v1011, 0.0
        %v1014 = vadd.f32 %v1012, %v1013
        %v1015 = vrot.slane %v1014, 4
        %v1016 = vadd.f32 %v1014, %v1015
        %v1017 = vrot.slane %v1016, 2
        %v1018 = vadd.f32 %v1016, %v1017
        %v1019 = vrot.slane %v1018, 1
        %v1020 = vadd.f32 %v1018, %v1019
        %s1021 = scalar_lea.vmem %s204, 3 [#allocation7]
        %1022 = vst.msk [vmem:[%s1021] sm:$0x1] %vm407, %v1020
        %v1023 = vmul.f32 %v1010, %v1010
        %v1024 = vmul.f32 %v1011, %v1011
        %v1025 = vsel %vm397, %v1023, 0.0
        %v1026 = vsel %vm397, %v1024, 0.0
        %v1027 = vadd.f32 %v1025, %v1026
        %v1028 = vrot.slane %v1027, 4
        %v1029 = vadd.f32 %v1027, %v1028
        %v1030 = vrot.slane %v1029, 2
        %v1031 = vadd.f32 %v1029, %v1030
        %v1032 = vrot.slane %v1031, 1
        %v1033 = vadd.f32 %v1031, %v1032
        %s1034 = scalar_lea.vmem %s211, 3 [#allocation8]
        %1035 = vst.msk [vmem:[%s1034] sm:$0x1] %vm407, %v1033
        %s1036 = sand.u32 %s80, 1
        %s1037 = scalar_lea.sflag [#allocation4], %s1036
        %s1038 = sand.u32 %s80, 1
        %s1039 = smul.addr %s1038, 4
        %s1040 = scalar_lea.vmem [#allocation7], %s1039
        %s1041 = sand.u32 %s106, 1
        %s1042 = scalar_lea.sflag [#allocation9], %s1041
        %s1043 = sand.u32 %s106, 1
        %s1044 = smul.addr %s1043, 4
        %s1045 = scalar_lea.vmem [#allocation8], %s1044
        // Predicated region
        $region37: #{tpu_custom_call.1} parent=27 // pred_check
          %p1046 = pneg %p90
        $region38: #{tpu_custom_call.1} parent=27 // pred_check_branch
          %1048 = sbr.rel (%p1046) target = $region40
        $region39: #{tpu_custom_call.1} parent=27 // pred_region
          %s1050 = ssub.s32 64, 64
          %1051 = vsyncadd %s1037, %s1050
          %s1052 = smul.addr %s25, 4
          %s1053 = smul.addr %s1052, 16
          %s1054 = scalar_lea.hbm %s2, %s1053
          %s1055 = sshll.u32 %s1040, 4
          %s1056 = int_to_ptr.vmem [resolvable:$true] %s1055
          %1061 = dma.vmem_to_hbm [thread:$0]  %s1056, 64, %s1054, %s1037, 16, 16, 1
        $region40: #{tpu_custom_call.1} parent=27 // pred_fallthru
          _
        // Predicated region
        $region41: #{tpu_custom_call.1} parent=27 // pred_check
          %p1062 = pneg %p116
        $region42: #{tpu_custom_call.1} parent=27 // pred_check_branch
          %1064 = sbr.rel (%p1062) target = $region44
        $region43: #{tpu_custom_call.1} parent=27 // pred_region
          %s1066 = ssub.s32 64, 64
          %1067 = vsyncadd %s1042, %s1066
          %s1068 = smul.addr %s25, 4
          %s1069 = smul.addr %s1068, 16
          %s1070 = scalar_lea.hbm %s3, %s1069
          %s1071 = sshll.u32 %s1045, 4
          %s1072 = int_to_ptr.vmem [resolvable:$true] %s1071
          %1077 = dma.vmem_to_hbm [thread:$0]  %s1072, 64, %s1070, %s1042, 16, 16, 1
        $region44: #{tpu_custom_call.1} parent=27 // pred_fallthru
          _
      $region28: #{tpu_custom_call.1} parent=5 // pred_fallthru
        _
      %p1078 = scmp.le.s32.totalorder 2, %s20
      // Predicated region
      $region45: #{tpu_custom_call.1} parent=5 // pred_check
        %p1079 = pneg %p1078
      $region46: #{tpu_custom_call.1} parent=5 // pred_check_branch
        %1081 = sbr.rel (%p1079) target = $region48
      $region47: #{tpu_custom_call.1} parent=5 // pred_region
        %s1082 = ssub.s32 %s20, 2
        // Predicated region
        $region49: #{tpu_custom_call.1} parent=47 // pred_check
          %p1083 = pneg %p96
        $region50: #{tpu_custom_call.1} parent=47 // pred_check_branch
          %1085 = sbr.rel (%p1083) target = $region52
        $region51: #{tpu_custom_call.1} parent=47 // pred_region
          %s1086 = sand.u32 %s81, 1
          %s1087 = scalar_lea.sflag [#allocation4], %s1086
          %s1088 = sand.u32 %s81, 1
          %s1089 = smul.addr %s1088, 4
          %s1090 = scalar_lea.vmem [#allocation7], %s1089
          %1091 = dma.done %s1087, 64
        $region52: #{tpu_custom_call.1} parent=47 // pred_fallthru
          _
        // Predicated region
        $region53: #{tpu_custom_call.1} parent=47 // pred_check
          %p1092 = pneg %p122
        $region54: #{tpu_custom_call.1} parent=47 // pred_check_branch
          %1094 = sbr.rel (%p1092) target = $region56
        $region55: #{tpu_custom_call.1} parent=47 // pred_region
          %s1095 = sand.u32 %s107, 1
          %s1096 = scalar_lea.sflag [#allocation9], %s1095
          %s1097 = sand.u32 %s107, 1
          %s1098 = smul.addr %s1097, 4
          %s1099 = scalar_lea.vmem [#allocation8], %s1098
          %1100 = dma.done %s1096, 64
        $region56: #{tpu_custom_call.1} parent=47 // pred_fallthru
          _
      $region48: #{tpu_custom_call.1} parent=5 // pred_fallthru
        _
    $region6: #{tpu_custom_call.1} parent=1 // loop_footer
      %s24 = sadd.s32 1, %s20
    $region7: #{tpu_custom_call.1} parent=1 // loop_footer_branch
      %19 = sbr.rel target = $region3
    $region8: #{tpu_custom_call.1} parent=1 // loop_exit
      _
    %1101 = vsyncpa [#allocation3], 1
    %s1102 = scalar_lea.sflag [#allocation3], 1
    %1103 = vsyncpa %s1102, 1
    %1104 = vsyncpa [#allocation4], 1
    %s1105 = scalar_lea.sflag [#allocation4], 1
    %1106 = vsyncpa %s1105, 1
    %1107 = vsyncpa [#allocation9], 1
    %s1108 = scalar_lea.sflag [#allocation9], 1
    %1109 = vsyncpa %s1108, 1
    %1110 = vsyncpa [#allocation5], 1
    %s1111 = scalar_lea.sflag [#allocation5], 1
    %1112 = vsyncpa %s1111, 1

</llo_original>
